<compile_context>
chip_gen: v7x
topology: tpu7x:2x2x1
jax: 0.10.0
libtpu: 0.0.40
codegen_flags: <defaults>
</compile_context>

<pallas_src>
import functools

import jax
import jax.numpy as jnp
from jax.experimental import pallas as pl
from jax.experimental.pallas import tpu as pltpu


def _round_up(n, m):
    return ((n + m - 1) // m) * m


_NEG = -1e30  # mask for padded logit lanes: exp underflows to exactly 0


# --------------------------------------------------------------------------- #
# Pass A: recurrent pass (serial over time chunks).
# --------------------------------------------------------------------------- #
def recurrent_kernel(x_ref, h0_ref, wxh_ref, whh_ref, bh_ref,
                     hprev_ref, hfin_ref, *, tc, b_pad, t_real, t_pad):
    c = pl.program_id(0)

    @pl.when(c == 0)
    def _():
        hfin_ref[...] = h0_ref[...]          # init the resident hidden carry

    wdt = wxh_ref.dtype
    # Whole-chunk input projection with the bias folded in: one wide matmul,
    # entirely off the serial h-dependence chain.
    xproj = (jnp.dot(x_ref[...].astype(wdt), wxh_ref[...],
                     preferred_element_type=jnp.float32)
             + bh_ref[...])

    whh = whh_ref[...]                       # resident weights, loaded once
    h = hfin_ref[...]                        # f32 carry (resident output block)

    for step in range(tc):                   # static unroll; serial path is
        lo = step * b_pad                    # a single h @ Wh_h per step
        hprev_ref[lo:lo + b_pad, :] = h.astype(hprev_ref.dtype)
        h_new = xproj[lo:lo + b_pad, :] + jnp.dot(
            h.astype(wdt), whh, preferred_element_type=jnp.float32)
        if t_pad != t_real:                  # only emitted if time is padded
            valid = (c * tc + step) < t_real
            h = jnp.where(valid, h_new, h)
        else:
            h = h_new

    hfin_ref[...] = h


# --------------------------------------------------------------------------- #
# Pass B: i2o projection + log-softmax (parallel over time chunks).
# --------------------------------------------------------------------------- #
def output_kernel(x_ref, hprev_ref, wxo_ref, who_ref, bo_ref, out_ref):
    wdt = wxo_ref.dtype
    logits = (jnp.dot(x_ref[...].astype(wdt), wxo_ref[...],
                      preferred_element_type=jnp.float32)
              + jnp.dot(hprev_ref[...].astype(wdt), who_ref[...],
                        preferred_element_type=jnp.float32)
              + bo_ref[...])                 # padded lanes carry -1e30

    # Numerically stable log-softmax over the (lane) class axis, f32 throughout.
    m = jnp.max(logits, axis=1, keepdims=True)
    shifted = logits - m
    lse = jnp.log(jnp.sum(jnp.exp(shifted), axis=1, keepdims=True))
    out_ref[...] = (shifted - lse).astype(out_ref.dtype)


# --------------------------------------------------------------------------- #
# One-time weight prep (split / transpose / lane-pad / dtype cast).
# --------------------------------------------------------------------------- #
def prepare_params(w_i2h, b_i2h, w_i2o, b_i2o, input_size,
                   compute_dtype=jnp.bfloat16):
    """nn.Linear layout in, padded kernel-layout out.

    w_i2h: [H, I+H], w_i2o: [O, I+H].  Uses [x,h] @ W.T == x @ Wx + h @ Wh.
    """
    I = input_size
    H, O = w_i2h.shape[0], w_i2o.shape[0]
    H_pad = _round_up(H, 128)
    O_pad = _round_up(O, 128)

    wx_h = jnp.zeros((I, H_pad), jnp.float32).at[:, :H].set(w_i2h[:, :I].T)
    wh_h = jnp.zeros((H_pad, H_pad), jnp.float32).at[:H, :H].set(w_i2h[:, I:].T)
    b_h = jnp.zeros((1, H_pad), jnp.float32).at[0, :H].set(b_i2h)

    wx_o = jnp.zeros((I, O_pad), jnp.float32).at[:, :O].set(w_i2o[:, :I].T)
    wh_o = jnp.zeros((H_pad, O_pad), jnp.float32).at[:H, :O].set(w_i2o[:, I:].T)
    b_o = jnp.full((1, O_pad), _NEG, jnp.float32).at[0, :O].set(b_i2o)

    params = (wx_h.astype(compute_dtype), wh_h.astype(compute_dtype), b_h,
              wx_o.astype(compute_dtype), wh_o.astype(compute_dtype), b_o)
    meta = dict(I=I, H=H, O=O, H_pad=H_pad, O_pad=O_pad)
    return params, meta


# --------------------------------------------------------------------------- #
# Wrapper: two pallas_calls over the whole sequence.
# --------------------------------------------------------------------------- #
def rnn_forward(xs, h0, *, params, meta, time_chunk=8):
    """xs: [T, B, I], h0: [B, H] -> (log_softmax outputs [T, B, O], h_T [B, H])."""
    wx_h, wh_h, b_h, wx_o, wh_o, b_o = params
    I, H, O = meta["I"], meta["H"], meta["O"]
    H_pad, O_pad = meta["H_pad"], meta["O_pad"]

    T, B, _ = xs.shape
    B_pad = max(8, _round_up(B, 8))
    TC = max(1, min(time_chunk, T))
    T_pad = _round_up(T, TC)
    n_chunks = T_pad // TC
    rows = TC * B_pad                         # rows per time-chunk block

    # Pack [T, B, I] -> lane/sublane-friendly 2D slab [T_pad*B_pad, I].
    xs_p = jnp.zeros((T_pad, B_pad, I), jnp.float32).at[:T, :B, :].set(xs)
    xs2d = xs_p.reshape(T_pad * B_pad, I)
    h0_p = jnp.zeros((B_pad, H_pad), jnp.float32).at[:B, :H].set(h0)

    # ---- Pass A: recurrence (serial over chunks) --------------------------- #
    kern_a = functools.partial(recurrent_kernel, tc=TC, b_pad=B_pad,
                               t_real=T, t_pad=T_pad)
    hprev2d, h_fin = pl.pallas_call(
        kern_a,
        grid=(n_chunks,),
        in_specs=[
            pl.BlockSpec((rows, I), lambda c: (c, 0)),         # streamed x chunk
            pl.BlockSpec((B_pad, H_pad), lambda c: (0, 0)),    # h0 (resident)
            pl.BlockSpec((I, H_pad), lambda c: (0, 0)),        # Wx_h (resident)
            pl.BlockSpec((H_pad, H_pad), lambda c: (0, 0)),    # Wh_h (resident)
            pl.BlockSpec((1, H_pad), lambda c: (0, 0)),        # b_h  (resident)
        ],
        out_specs=(
            pl.BlockSpec((rows, H_pad), lambda c: (c, 0)),     # h_{t-1} per step
            pl.BlockSpec((B_pad, H_pad), lambda c: (0, 0)),    # carried hidden
        ),
        out_shape=(
            jax.ShapeDtypeStruct((T_pad * B_pad, H_pad), jnp.float32),
            jax.ShapeDtypeStruct((B_pad, H_pad), jnp.float32),
        ),
        compiler_params=pltpu.CompilerParams(
            dimension_semantics=("arbitrary",)),               # carry => serial
    )(xs2d, h0_p, wx_h, wh_h, b_h)

    # ---- Pass B: i2o + log-softmax (parallel over chunks) ------------------ #
    outs2d = pl.pallas_call(
        output_kernel,
        grid=(n_chunks,),
        in_specs=[
            pl.BlockSpec((rows, I), lambda c: (c, 0)),         # x chunk
            pl.BlockSpec((rows, H_pad), lambda c: (c, 0)),     # h_{t-1} chunk
            pl.BlockSpec((I, O_pad), lambda c: (0, 0)),        # Wx_o (resident)
            pl.BlockSpec((H_pad, O_pad), lambda c: (0, 0)),    # Wh_o (resident)
            pl.BlockSpec((1, O_pad), lambda c: (0, 0)),        # b_o  (resident)
        ],
        out_specs=pl.BlockSpec((rows, O_pad), lambda c: (c, 0)),
        out_shape=jax.ShapeDtypeStruct((T_pad * B_pad, O_pad), jnp.float32),
        compiler_params=pltpu.CompilerParams(
            dimension_semantics=("parallel",)),                # megacore on v7x
    )(xs2d, hprev2d, wx_o, wh_o, b_o)

    outs = outs2d.reshape(T_pad, B_pad, O_pad)[:T, :B, :O]
    return outs, h_fin[:B, :H]


def init_params(key, input_size, hidden_size, output_size):
    """Deterministic init matching nn.Linear's uniform(-1/sqrt(fan_in), +...)."""
    k1, k2, k3, k4 = jax.random.split(key, 4)
    fan_in = input_size + hidden_size
    bound = 1.0 / jnp.sqrt(fan_in)
    w_i2h = jax.random.uniform(k1, (hidden_size, fan_in), jnp.float32, -bound, bound)
    b_i2h = jax.random.uniform(k2, (hidden_size,), jnp.float32, -bound, bound)
    w_i2o = jax.random.uniform(k3, (output_size, fan_in), jnp.float32, -bound, bound)
    b_i2o = jax.random.uniform(k4, (output_size,), jnp.float32, -bound, bound)
    return w_i2h, b_i2h, w_i2o, b_i2o


if __name__ == "__main__":
    input_size, hidden_size, output_size = 16, 32, 8
    batch, seq_len = 2, 8

    key = jax.random.PRNGKey(0)
    kp, kx = jax.random.split(key)
    w_i2h, b_i2h, w_i2o, b_i2o = init_params(kp, input_size, hidden_size, output_size)

    xs = jax.random.normal(kx, (seq_len, batch, input_size), jnp.float32)
    h0 = jnp.zeros((batch, hidden_size), jnp.float32)   # initHidden(), broadcast to batch

    # Pure-JAX reference: step the PyTorch-semantics cell over the sequence.
    def ref_step(h, x):
        combined = jnp.concatenate([x, h], axis=1)
        h_new = combined @ w_i2h.T + b_i2h
        logits = combined @ w_i2o.T + b_i2o
        out = logits - jax.scipy.special.logsumexp(logits, axis=1, keepdims=True)
        return h_new, out

    h_ref, outs_ref = jax.lax.scan(ref_step, h0, xs)

    # f32 mode: exact check; bf16 mode: MXU-optimized path, loose check.
    for mode_dtype, atol in ((jnp.float32, 1e-5), (jnp.bfloat16, 5e-2)):
        params, meta = prepare_params(w_i2h, b_i2h, w_i2o, b_i2o, input_size,
                                      compute_dtype=mode_dtype)
        fwd = jax.jit(functools.partial(rnn_forward, params=params, meta=meta,
                                        time_chunk=4))   # 2 chunks: exercises carry
        outs, h_T = fwd(xs, h0)
        jax.block_until_ready((outs, h_T))

        assert outs.shape == (seq_len, batch, output_size)
        assert h_T.shape == (batch, hidden_size)
        assert jnp.allclose(outs, outs_ref, atol=atol), f"output mismatch ({mode_dtype})"
        assert jnp.allclose(h_T, h_ref, atol=atol), f"hidden mismatch ({mode_dtype})"

    print("KERNEL_OK")
</pallas_src>

<mosaic_0001>
module attributes {stable_mosaic.version = 11 : i64} {
  func.func @output_kernel(%arg0: i32, %arg1: memref<32x16xf32, #tpu.memory_space<vmem>>, %arg2: memref<32x128xf32, #tpu.memory_space<vmem>>, %arg3: memref<16x128xf32, #tpu.memory_space<vmem>>, %arg4: memref<128x128xf32, #tpu.memory_space<vmem>>, %arg5: memref<1x128xf32, #tpu.memory_space<vmem>>, %arg6: memref<32x128xf32, #tpu.memory_space<vmem>>) attributes {dimension_semantics = [#tpu.dimension_semantics<parallel>], iteration_bounds = array<i64: 2>, scalar_prefetch = 0 : i64, scratch_operands = 0 : i64, tpu.core_type = #tpu.core_type<tc>, window_params = [{transform_indices = @transform_0, window_bounds = array<i64: 32, 16>}, {transform_indices = @transform_1, window_bounds = array<i64: 32, 128>}, {pipeline_mode = #tpu.pipeline_mode<synchronous>, transform_indices = @transform_2, window_bounds = array<i64: 16, 128>}, {pipeline_mode = #tpu.pipeline_mode<synchronous>, transform_indices = @transform_3, window_bounds = array<i64: 128, 128>}, {pipeline_mode = #tpu.pipeline_mode<synchronous>, transform_indices = @transform_4, window_bounds = array<i64: 1, 128>}, {transform_indices = @transform_5, window_bounds = array<i64: 32, 128>}]} {
    %c0 = arith.constant 0 : index
    %c0_0 = arith.constant 0 : index
    %0 = vector.load %arg1[%c0, %c0_0] : memref<32x16xf32, #tpu.memory_space<vmem>>, vector<32x16xf32>
    %c0_1 = arith.constant 0 : index
    %c0_2 = arith.constant 0 : index
    %1 = vector.load %arg3[%c0_1, %c0_2] : memref<16x128xf32, #tpu.memory_space<vmem>>, vector<16x128xf32>
    %cst = arith.constant dense<0.000000e+00> : vector<32x128xf32>
    %2 = tpu.matmul %0, %1, %cst {dimension_numbers = #tpu.dot_dimension_numbers<[1], [0], [0], [1], [0, 0, 1, 1], [], []>} : vector<32x16xf32>, vector<16x128xf32>, vector<32x128xf32> -> vector<32x128xf32>
    %c0_3 = arith.constant 0 : index
    %c0_4 = arith.constant 0 : index
    %3 = vector.load %arg2[%c0_3, %c0_4] : memref<32x128xf32, #tpu.memory_space<vmem>>, vector<32x128xf32>
    %c0_5 = arith.constant 0 : index
    %c0_6 = arith.constant 0 : index
    %4 = vector.load %arg4[%c0_5, %c0_6] : memref<128x128xf32, #tpu.memory_space<vmem>>, vector<128x128xf32>
    %cst_7 = arith.constant dense<0.000000e+00> : vector<32x128xf32>
    %5 = tpu.matmul %3, %4, %cst_7 {dimension_numbers = #tpu.dot_dimension_numbers<[1], [0], [0], [1], [0, 0, 1, 1], [], []>} : vector<32x128xf32>, vector<128x128xf32>, vector<32x128xf32> -> vector<32x128xf32>
    %6 = arith.addf %2, %5 : vector<32x128xf32>
    %c0_8 = arith.constant 0 : index
    %c0_9 = arith.constant 0 : index
    %7 = vector.load %arg5[%c0_8, %c0_9] : memref<1x128xf32, #tpu.memory_space<vmem>>, vector<1x128xf32>
    %8 = vector.broadcast %7 : vector<1x128xf32> to vector<32x128xf32>
    %9 = arith.addf %6, %8 : vector<32x128xf32>
    %cst_10 = arith.constant dense<0xFF800000> : vector<32xf32>
    %10 = vector.multi_reduction <maximumf>, %9, %cst_10 [1] : vector<32x128xf32> to vector<32xf32>
    %11 = vector.shape_cast %10 : vector<32xf32> to vector<32x1xf32>
    %12 = vector.broadcast %11 : vector<32x1xf32> to vector<32x128xf32>
    %13 = arith.subf %9, %12 : vector<32x128xf32>
    %14 = math.exp %13 : vector<32x128xf32>
    %cst_11 = arith.constant dense<0.000000e+00> : vector<32xf32>
    %15 = vector.multi_reduction <add>, %14, %cst_11 [1] : vector<32x128xf32> to vector<32xf32>
    %16 = vector.shape_cast %15 : vector<32xf32> to vector<32x1xf32>
    %17 = math.log %16 : vector<32x1xf32>
    %18 = vector.broadcast %17 : vector<32x1xf32> to vector<32x128xf32>
    %19 = arith.subf %13, %18 : vector<32x128xf32>
    %c0_12 = arith.constant 0 : index
    %c0_13 = arith.constant 0 : index
    %20 = vector.load %arg6[%c0_12, %c0_13] : memref<32x128xf32, #tpu.memory_space<vmem>>, vector<32x128xf32>
    tpu.vector_store %arg6[%c0_12, %c0_13], %19 {strides = array<i32>} : memref<32x128xf32, #tpu.memory_space<vmem>>, vector<32x128xf32>,
    return
  }
  func.func @transform_0(%arg0: i32) -> (i32, i32) {
    %c0_i32 = arith.constant 0 : i32
    %c0_i32_0 = arith.constant 0 : i32
    return %arg0, %c0_i32 : i32, i32
  }
  func.func @transform_1(%arg0: i32) -> (i32, i32) {
    %c0_i32 = arith.constant 0 : i32
    %c0_i32_0 = arith.constant 0 : i32
    return %arg0, %c0_i32 : i32, i32
  }
  func.func @transform_2(%arg0: i32) -> (i32, i32) {
    %c0_i32 = arith.constant 0 : i32
    %c0_i32_0 = arith.constant 0 : i32
    %c0_i32_1 = arith.constant 0 : i32
    return %c0_i32, %c0_i32_0 : i32, i32
  }
  func.func @transform_3(%arg0: i32) -> (i32, i32) {
    %c0_i32 = arith.constant 0 : i32
    %c0_i32_0 = arith.constant 0 : i32
    %c0_i32_1 = arith.constant 0 : i32
    return %c0_i32, %c0_i32_0 : i32, i32
  }
  func.func @transform_4(%arg0: i32) -> (i32, i32) {
    %c0_i32 = arith.constant 0 : i32
    %c0_i32_0 = arith.constant 0 : i32
    %c0_i32_1 = arith.constant 0 : i32
    return %c0_i32, %c0_i32_0 : i32, i32
  }
  func.func @transform_5(%arg0: i32) -> (i32, i32) {
    %c0_i32 = arith.constant 0 : i32
    %c0_i32_0 = arith.constant 0 : i32
    return %arg0, %c0_i32 : i32, i32
  }
}

module attributes {stable_mosaic.version = 11 : i64} {
  func.func @recurrent_kernel(%arg0: i32, %arg1: memref<32x16xf32, #tpu.memory_space<vmem>>, %arg2: memref<8x128xf32, #tpu.memory_space<vmem>>, %arg3: memref<16x128xf32, #tpu.memory_space<vmem>>, %arg4: memref<128x128xf32, #tpu.memory_space<vmem>>, %arg5: memref<1x128xf32, #tpu.memory_space<vmem>>, %arg6: memref<32x128xf32, #tpu.memory_space<vmem>>, %arg7: memref<8x128xf32, #tpu.memory_space<vmem>>) attributes {dimension_semantics = [#tpu.dimension_semantics<arbitrary>], iteration_bounds = array<i64: 2>, scalar_prefetch = 0 : i64, scratch_operands = 0 : i64, tpu.core_type = #tpu.core_type<tc>, window_params = [{transform_indices = @transform_0, window_bounds = array<i64: 32, 16>}, {pipeline_mode = #tpu.pipeline_mode<synchronous>, transform_indices = @transform_1, window_bounds = array<i64: 8, 128>}, {pipeline_mode = #tpu.pipeline_mode<synchronous>, transform_indices = @transform_2, window_bounds = array<i64: 16, 128>}, {pipeline_mode = #tpu.pipeline_mode<synchronous>, transform_indices = @transform_3, window_bounds = array<i64: 128, 128>}, {pipeline_mode = #tpu.pipeline_mode<synchronous>, transform_indices = @transform_4, window_bounds = array<i64: 1, 128>}, {transform_indices = @transform_5, window_bounds = array<i64: 32, 128>}, {pipeline_mode = #tpu.pipeline_mode<synchronous>, transform_indices = @transform_6, window_bounds = array<i64: 8, 128>}]} {
    %c0_i32 = arith.constant 0 : i32
    %0 = arith.cmpi eq, %arg0, %c0_i32 : i32
    %1 = arith.extui %0 : i1 to i32
    %c0_i32_0 = arith.constant 0 : i32
    %2 = arith.cmpi ne, %1, %c0_i32_0 : i32
    scf.if %2 {
      %c0_21 = arith.constant 0 : index
      %c0_22 = arith.constant 0 : index
      %28 = vector.load %arg2[%c0_21, %c0_22] : memref<8x128xf32, #tpu.memory_space<vmem>>, vector<8x128xf32>
      %c0_23 = arith.constant 0 : index
      %c0_24 = arith.constant 0 : index
      %29 = vector.load %arg7[%c0_23, %c0_24] : memref<8x128xf32, #tpu.memory_space<vmem>>, vector<8x128xf32>
      tpu.vector_store %arg7[%c0_23, %c0_24], %28 {strides = array<i32>} : memref<8x128xf32, #tpu.memory_space<vmem>>, vector<8x128xf32>,
    } else {
    }
    %c0 = arith.constant 0 : index
    %c0_1 = arith.constant 0 : index
    %3 = vector.load %arg1[%c0, %c0_1] : memref<32x16xf32, #tpu.memory_space<vmem>>, vector<32x16xf32>
    %c0_2 = arith.constant 0 : index
    %c0_3 = arith.constant 0 : index
    %4 = vector.load %arg3[%c0_2, %c0_3] : memref<16x128xf32, #tpu.memory_space<vmem>>, vector<16x128xf32>
    %cst = arith.constant dense<0.000000e+00> : vector<32x128xf32>
    %5 = tpu.matmul %3, %4, %cst {dimension_numbers = #tpu.dot_dimension_numbers<[1], [0], [0], [1], [0, 0, 1, 1], [], []>} : vector<32x16xf32>, vector<16x128xf32>, vector<32x128xf32> -> vector<32x128xf32>
    %c0_4 = arith.constant 0 : index
    %c0_5 = arith.constant 0 : index
    %6 = vector.load %arg5[%c0_4, %c0_5] : memref<1x128xf32, #tpu.memory_space<vmem>>, vector<1x128xf32>
    %7 = vector.broadcast %6 : vector<1x128xf32> to vector<32x128xf32>
    %8 = arith.addf %5, %7 : vector<32x128xf32>
    %c0_6 = arith.constant 0 : index
    %c0_7 = arith.constant 0 : index
    %9 = vector.load %arg4[%c0_6, %c0_7] : memref<128x128xf32, #tpu.memory_space<vmem>>, vector<128x128xf32>
    %c0_8 = arith.constant 0 : index
    %c0_9 = arith.constant 0 : index
    %10 = vector.load %arg7[%c0_8, %c0_9] : memref<8x128xf32, #tpu.memory_space<vmem>>, vector<8x128xf32>
    %c0_10 = arith.constant 0 : index
    %c0_11 = arith.constant 0 : index
    %11 = vector.load %arg6[%c0_10, %c0_11] : memref<32x128xf32, #tpu.memory_space<vmem>>, vector<8x128xf32>
    tpu.vector_store %arg6[%c0_10, %c0_11], %10 {strides = array<i32>} : memref<32x128xf32, #tpu.memory_space<vmem>>, vector<8x128xf32>,
    %12 = vector.extract_strided_slice %8 {offsets = [0, 0], sizes = [8, 128], strides = [1, 1]} : vector<32x128xf32> to vector<8x128xf32>
    %cst_12 = arith.constant dense<0.000000e+00> : vector<8x128xf32>
    %13 = tpu.matmul %10, %9, %cst_12 {dimension_numbers = #tpu.dot_dimension_numbers<[1], [0], [0], [1], [0, 0, 1, 1], [], []>} : vector<8x128xf32>, vector<128x128xf32>, vector<8x128xf32> -> vector<8x128xf32>
    %14 = arith.addf %12, %13 : vector<8x128xf32>
    %c8 = arith.constant 8 : index
    %c0_13 = arith.constant 0 : index
    %15 = vector.load %arg6[%c8, %c0_13] : memref<32x128xf32, #tpu.memory_space<vmem>>, vector<8x128xf32>
    tpu.vector_store %arg6[%c8, %c0_13], %14 {strides = array<i32>} : memref<32x128xf32, #tpu.memory_space<vmem>>, vector<8x128xf32>,
    %16 = vector.extract_strided_slice %8 {offsets = [8, 0], sizes = [8, 128], strides = [1, 1]} : vector<32x128xf32> to vector<8x128xf32>
    %cst_14 = arith.constant dense<0.000000e+00> : vector<8x128xf32>
    %17 = tpu.matmul %14, %9, %cst_14 {dimension_numbers = #tpu.dot_dimension_numbers<[1], [0], [0], [1], [0, 0, 1, 1], [], []>} : vector<8x128xf32>, vector<128x128xf32>, vector<8x128xf32> -> vector<8x128xf32>
    %18 = arith.addf %16, %17 : vector<8x128xf32>
    %c16 = arith.constant 16 : index
    %c0_15 = arith.constant 0 : index
    %19 = vector.load %arg6[%c16, %c0_15] : memref<32x128xf32, #tpu.memory_space<vmem>>, vector<8x128xf32>
    tpu.vector_store %arg6[%c16, %c0_15], %18 {strides = array<i32>} : memref<32x128xf32, #tpu.memory_space<vmem>>, vector<8x128xf32>,
    %20 = vector.extract_strided_slice %8 {offsets = [16, 0], sizes = [8, 128], strides = [1, 1]} : vector<32x128xf32> to vector<8x128xf32>
    %cst_16 = arith.constant dense<0.000000e+00> : vector<8x128xf32>
    %21 = tpu.matmul %18, %9, %cst_16 {dimension_numbers = #tpu.dot_dimension_numbers<[1], [0], [0], [1], [0, 0, 1, 1], [], []>} : vector<8x128xf32>, vector<128x128xf32>, vector<8x128xf32> -> vector<8x128xf32>
    %22 = arith.addf %20, %21 : vector<8x128xf32>
    %c24 = arith.constant 24 : index
    %c0_17 = arith.constant 0 : index
    %23 = vector.load %arg6[%c24, %c0_17] : memref<32x128xf32, #tpu.memory_space<vmem>>, vector<8x128xf32>
    tpu.vector_store %arg6[%c24, %c0_17], %22 {strides = array<i32>} : memref<32x128xf32, #tpu.memory_space<vmem>>, vector<8x128xf32>,
    %24 = vector.extract_strided_slice %8 {offsets = [24, 0], sizes = [8, 128], strides = [1, 1]} : vector<32x128xf32> to vector<8x128xf32>
    %cst_18 = arith.constant dense<0.000000e+00> : vector<8x128xf32>
    %25 = tpu.matmul %22, %9, %cst_18 {dimension_numbers = #tpu.dot_dimension_numbers<[1], [0], [0], [1], [0, 0, 1, 1], [], []>} : vector<8x128xf32>, vector<128x128xf32>, vector<8x128xf32> -> vector<8x128xf32>
    %26 = arith.addf %24, %25 : vector<8x128xf32>
    %c0_19 = arith.constant 0 : index
    %c0_20 = arith.constant 0 : index
    %27 = vector.load %arg7[%c0_19, %c0_20] : memref<8x128xf32, #tpu.memory_space<vmem>>, vector<8x128xf32>
    tpu.vector_store %arg7[%c0_19, %c0_20], %26 {strides = array<i32>} : memref<8x128xf32, #tpu.memory_space<vmem>>, vector<8x128xf32>,
    return
  }
  func.func @transform_0(%arg0: i32) -> (i32, i32) {
    %c0_i32 = arith.constant 0 : i32
    %c0_i32_0 = arith.constant 0 : i32
    return %arg0, %c0_i32 : i32, i32
  }
  func.func @transform_1(%arg0: i32) -> (i32, i32) {
    %c0_i32 = arith.constant 0 : i32
    %c0_i32_0 = arith.constant 0 : i32
    %c0_i32_1 = arith.constant 0 : i32
    return %c0_i32, %c0_i32_0 : i32, i32
  }
  func.func @transform_2(%arg0: i32) -> (i32, i32) {
    %c0_i32 = arith.constant 0 : i32
    %c0_i32_0 = arith.constant 0 : i32
    %c0_i32_1 = arith.constant 0 : i32
    return %c0_i32, %c0_i32_0 : i32, i32
  }
  func.func @transform_3(%arg0: i32) -> (i32, i32) {
    %c0_i32 = arith.constant 0 : i32
    %c0_i32_0 = arith.constant 0 : i32
    %c0_i32_1 = arith.constant 0 : i32
    return %c0_i32, %c0_i32_0 : i32, i32
  }
  func.func @transform_4(%arg0: i32) -> (i32, i32) {
    %c0_i32 = arith.constant 0 : i32
    %c0_i32_0 = arith.constant 0 : i32
    %c0_i32_1 = arith.constant 0 : i32
    return %c0_i32, %c0_i32_0 : i32, i32
  }
  func.func @transform_5(%arg0: i32) -> (i32, i32) {
    %c0_i32 = arith.constant 0 : i32
    %c0_i32_0 = arith.constant 0 : i32
    return %arg0, %c0_i32 : i32, i32
  }
  func.func @transform_6(%arg0: i32) -> (i32, i32) {
    %c0_i32 = arith.constant 0 : i32
    %c0_i32_0 = arith.constant 0 : i32
    %c0_i32_1 = arith.constant 0 : i32
    return %c0_i32, %c0_i32_0 : i32, i32
  }
}

</mosaic_0001>

<llo_original>
// kernel: rnn_forward.3
$region0: #{rnn_forward.3}
  #allocation0 [shape = 'u32[]', space=smem, size = 0x4, offset = 0x4, fixed_abs, tag = 'smem constant byte address 0x4 - core index']
  #allocation1 [shape = 'u32[144,128]{1,0:T(1,128)}', space=vmem, size = 0x12000, scoped, tag = 'internal scratch']
  %s0 = inlined_call_operand.vmem [shape: f32[64,16], index: 0, kind: input, shape index: {}]
  %s1 = inlined_call_operand.vmem [shape: f32[64,128], index: 1, kind: input, shape index: {}]
  %s2 = inlined_call_operand.vmem [shape: f32[16,128], index: 2, kind: input, shape index: {}]
  %s3 = inlined_call_operand.vmem [shape: f32[128,128], index: 3, kind: input, shape index: {}]
  %s4 = inlined_call_operand.vmem [shape: f32[1,128], index: 4, kind: input, shape index: {}]
  %s5 = inlined_call_operand.vmem [shape: f32[64,128], index: 5, kind: output, shape index: {}]
  %s6 = sld [smem:[#allocation0]]
  $region53: #{rnn_forward.3} parent=0
    _
  %s8 = ssub.s32 1, %s6
  %s9 = scalar_select 0, %s8, %s6
  loop: start=0, step=1, limit=4
  $region2: #{rnn_forward.3} parent=0 // loop_pre_header
    _
  $region3: #{rnn_forward.3} parent=0 // loop_header
    %s11 = sphi 0, %s15
    %p12 = scmp.ge.s32.totalorder %s11, 4
    %s21 = sphi 0, %s23
    %s24 = sphi 0, %s21
    %s25 = sphi 0, %s24
    %s41 = sphi 0, %s25
    %s47 = sphi 0, %s49
    %s50 = sphi 0, %s47
    %s51 = sphi 0, %s50
    %s67 = sphi 0, %s51
    %s71 = sphi 0, %s71
    %s73 = sphi 0, %s71
    %s74 = sphi 0, %s73
    %s88 = sphi 0, %s74
    %s92 = sphi 0, %s92
    %s94 = sphi 0, %s92
    %s95 = sphi 0, %s94
    %s109 = sphi 0, %s95
    %s113 = sphi 0, %s113
    %s115 = sphi 0, %s113
    %s116 = sphi 0, %s115
    %s130 = sphi 0, %s116
    %s136 = sphi 0, %s138
    %s139 = sphi 0, %s136
    %s140 = sphi 0, %s139
    %s156 = sphi 0, %s140
  $region4: #{rnn_forward.3} parent=0 // loop_header_branch
    %14 = sbr.rel (%p12) target = $region8
  $region5: #{rnn_forward.3} parent=0 // loop_body
    %s16 = ssub.s32 %s11, 1
    %s17 = ssub.s32 %s11, 2
    %s18 = sadd.s32 %s11, 1
    %s19 = ssub.s32 %s11, %s18
    %p20 = scmp.eq.s32.totalorder %s19, 0
    %s22 = sadd.s32 %s21, 1
    %s23 = scalar_select %p20, %s21, %s22
    %p26 = pneg %p20
    %p27 = scmp.eq.s32.totalorder %s11, 1
    %p28 = por %p26, %p27
    %p29 = scmp.ne.s32.totalorder %s21, %s24
    %p30 = scmp.eq.s32.totalorder %s11, 0
    %p31 = por %p29, %p30
    %p32 = scmp.ne.s32.totalorder %s21, %s24
    %p33 = scmp.eq.s32.totalorder %s16, 1
    %p34 = por %p32, %p33
    %p35 = scmp.ne.s32.totalorder %s24, %s25
    %p36 = scmp.eq.s32.totalorder %s16, 0
    %p37 = por %p35, %p36
    %p38 = scmp.ne.s32.totalorder %s24, %s25
    %p39 = scmp.eq.s32.totalorder %s17, 1
    %p40 = por %p38, %p39
    %p42 = scmp.ne.s32.totalorder %s25, %s41
    %p43 = scmp.eq.s32.totalorder %s17, 0
    %p44 = por %p42, %p43
    %s45 = ssub.s32 %s11, %s18
    %p46 = scmp.eq.s32.totalorder %s45, 0
    %s48 = sadd.s32 %s47, 1
    %s49 = scalar_select %p46, %s47, %s48
    %p52 = pneg %p46
    %p53 = scmp.eq.s32.totalorder %s11, 1
    %p54 = por %p52, %p53
    %p55 = scmp.ne.s32.totalorder %s47, %s50
    %p56 = scmp.eq.s32.totalorder %s11, 0
    %p57 = por %p55, %p56
    %p58 = scmp.ne.s32.totalorder %s47, %s50
    %p59 = scmp.eq.s32.totalorder %s16, 1
    %p60 = por %p58, %p59
    %p61 = scmp.ne.s32.totalorder %s50, %s51
    %p62 = scmp.eq.s32.totalorder %s16, 0
    %p63 = por %p61, %p62
    %p64 = scmp.ne.s32.totalorder %s50, %s51
    %p65 = scmp.eq.s32.totalorder %s17, 1
    %p66 = por %p64, %p65
    %p68 = scmp.ne.s32.totalorder %s51, %s67
    %p69 = scmp.eq.s32.totalorder %s17, 0
    %p70 = por %p68, %p69
    %s72 = sadd.s32 %s71, 1
    %p75 = scmp.eq.s32.totalorder %s11, 1
    %p76 = scmp.ne.s32.totalorder %s71, %s73
    %p77 = scmp.eq.s32.totalorder %s11, 0
    %p78 = por %p76, %p77
    %p79 = scmp.ne.s32.totalorder %s71, %s73
    %p80 = scmp.eq.s32.totalorder %s16, 1
    %p81 = por %p79, %p80
    %p82 = scmp.ne.s32.totalorder %s73, %s74
    %p83 = scmp.eq.s32.totalorder %s16, 0
    %p84 = por %p82, %p83
    %p85 = scmp.ne.s32.totalorder %s73, %s74
    %p86 = scmp.eq.s32.totalorder %s17, 1
    %p87 = por %p85, %p86
    %p89 = scmp.ne.s32.totalorder %s74, %s88
    %p90 = scmp.eq.s32.totalorder %s17, 0
    %p91 = por %p89, %p90
    %s93 = sadd.s32 %s92, 1
    %p96 = scmp.eq.s32.totalorder %s11, 1
    %p97 = scmp.ne.s32.totalorder %s92, %s94
    %p98 = scmp.eq.s32.totalorder %s11, 0
    %p99 = por %p97, %p98
    %p100 = scmp.ne.s32.totalorder %s92, %s94
    %p101 = scmp.eq.s32.totalorder %s16, 1
    %p102 = por %p100, %p101
    %p103 = scmp.ne.s32.totalorder %s94, %s95
    %p104 = scmp.eq.s32.totalorder %s16, 0
    %p105 = por %p103, %p104
    %p106 = scmp.ne.s32.totalorder %s94, %s95
    %p107 = scmp.eq.s32.totalorder %s17, 1
    %p108 = por %p106, %p107
    %p110 = scmp.ne.s32.totalorder %s95, %s109
    %p111 = scmp.eq.s32.totalorder %s17, 0
    %p112 = por %p110, %p111
    %s114 = sadd.s32 %s113, 1
    %p117 = scmp.eq.s32.totalorder %s11, 1
    %p118 = scmp.ne.s32.totalorder %s113, %s115
    %p119 = scmp.eq.s32.totalorder %s11, 0
    %p120 = por %p118, %p119
    %p121 = scmp.ne.s32.totalorder %s113, %s115
    %p122 = scmp.eq.s32.totalorder %s16, 1
    %p123 = por %p121, %p122
    %p124 = scmp.ne.s32.totalorder %s115, %s116
    %p125 = scmp.eq.s32.totalorder %s16, 0
    %p126 = por %p124, %p125
    %p127 = scmp.ne.s32.totalorder %s115, %s116
    %p128 = scmp.eq.s32.totalorder %s17, 1
    %p129 = por %p127, %p128
    %p131 = scmp.ne.s32.totalorder %s116, %s130
    %p132 = scmp.eq.s32.totalorder %s17, 0
    %p133 = por %p131, %p132
    %s134 = ssub.s32 %s11, %s18
    %p135 = scmp.eq.s32.totalorder %s134, 0
    %s137 = sadd.s32 %s136, 1
    %s138 = scalar_select %p135, %s136, %s137
    %p141 = pneg %p135
    %p142 = scmp.eq.s32.totalorder %s11, 1
    %p143 = por %p141, %p142
    %p144 = scmp.ne.s32.totalorder %s136, %s139
    %p145 = scmp.eq.s32.totalorder %s11, 0
    %p146 = por %p144, %p145
    %p147 = scmp.ne.s32.totalorder %s136, %s139
    %p148 = scmp.eq.s32.totalorder %s16, 1
    %p149 = por %p147, %p148
    %p150 = scmp.ne.s32.totalorder %s139, %s140
    %p151 = scmp.eq.s32.totalorder %s16, 0
    %p152 = por %p150, %p151
    %p153 = scmp.ne.s32.totalorder %s139, %s140
    %p154 = scmp.eq.s32.totalorder %s17, 1
    %p155 = por %p153, %p154
    %p157 = scmp.ne.s32.totalorder %s140, %s156
    %p158 = scmp.eq.s32.totalorder %s17, 0
    %p159 = por %p157, %p158
    %p160 = scmp.le.s32.totalorder 1, %s11
    %p161 = scmp.lt.s32.totalorder %s11, 3
    %p162 = pnand %p160, %p161
    %p163 = pneg %p162
    // Predicated region
    $region9: #{rnn_forward.3} parent=5 // pred_check
      _
    $region10: #{rnn_forward.3} parent=5 // pred_check_branch
      %165 = sbr.rel (%p162) target = $region12
    $region11: #{rnn_forward.3} parent=5 // pred_region
      %s166 = ssub.s32 %s11, 1
      // Predicated region
      $region13: #{rnn_forward.3} parent=11 // pred_check
        %p167 = pneg %p84
      $region14: #{rnn_forward.3} parent=11 // pred_check_branch
        %169 = sbr.rel (%p167) target = $region16
      $region15: #{rnn_forward.3} parent=11 // pred_region
        _
      $region16: #{rnn_forward.3} parent=11 // pred_fallthru
        _
      // Predicated region
      $region17: #{rnn_forward.3} parent=11 // pred_check
        %p170 = pneg %p105
      $region18: #{rnn_forward.3} parent=11 // pred_check_branch
        %172 = sbr.rel (%p170) target = $region20
      $region19: #{rnn_forward.3} parent=11 // pred_region
        _
      $region20: #{rnn_forward.3} parent=11 // pred_fallthru
        _
      // Predicated region
      $region21: #{rnn_forward.3} parent=11 // pred_check
        %p173 = pneg %p126
      $region22: #{rnn_forward.3} parent=11 // pred_check_branch
        %175 = sbr.rel (%p173) target = $region24
      $region23: #{rnn_forward.3} parent=11 // pred_region
        _
      $region24: #{rnn_forward.3} parent=11 // pred_fallthru
        _
    $region12: #{rnn_forward.3} parent=5 // pred_fallthru
      _
    %p176 = scmp.lt.s32.totalorder %s11, 2
    // Predicated region
    $region25: #{rnn_forward.3} parent=5 // pred_check
      %p177 = pneg %p176
    $region26: #{rnn_forward.3} parent=5 // pred_check_branch
      %179 = sbr.rel (%p177) target = $region28
    $region27: #{rnn_forward.3} parent=5 // pred_region
      // Predicated region
      $region29: #{rnn_forward.3} parent=27 // pred_check
        %p180 = pneg %p31
      $region30: #{rnn_forward.3} parent=27 // pred_check_branch
        %182 = sbr.rel (%p180) target = $region32
      $region31: #{rnn_forward.3} parent=27 // pred_region
        %s183 = smul.u32 4, %s11
        %p184 = scmp.lt.s32.totalorder %s183, 7
        %s185 = scalar_select %p184, %s183, 7
        %s186 = smul.addr %s185, 8
        %s187 = scalar_lea.vmem %s0, %s186
        %s188 = smul.u32 4, %s11
      $region32: #{rnn_forward.3} parent=27 // pred_fallthru
        _
      // Predicated region
      $region33: #{rnn_forward.3} parent=27 // pred_check
        %p189 = pneg %p57
      $region34: #{rnn_forward.3} parent=27 // pred_check_branch
        %191 = sbr.rel (%p189) target = $region36
      $region35: #{rnn_forward.3} parent=27 // pred_region
        %s192 = smul.u32 4, %s11
        %p193 = scmp.lt.s32.totalorder %s192, 7
        %s194 = scalar_select %p193, %s192, 7
        %s195 = smul.addr %s194, 8
        %s196 = scalar_lea.vmem %s1, %s195
        %s197 = smul.u32 4, %s11
      $region36: #{rnn_forward.3} parent=27 // pred_fallthru
        _
    $region28: #{rnn_forward.3} parent=5 // pred_fallthru
      _
    %p198 = scmp.le.s32.totalorder 1, %s11
    %p199 = scmp.lt.s32.totalorder %s11, 3
    %p200 = pnand %p198, %p199
    %p201 = pneg %p200
    // Predicated region
    $region37: #{rnn_forward.3} parent=5 // pred_check
      _
    $region38: #{rnn_forward.3} parent=5 // pred_check_branch
      %203 = sbr.rel (%p200) target = $region40
    $region39: #{rnn_forward.3} parent=5 // pred_region
      %s204 = ssub.s32 %s11, 1
      %s205 = smul.u32 4, %s16
      %p206 = scmp.lt.s32.totalorder %s205, 7
      %s207 = scalar_select %p206, %s205, 7
      %s208 = smul.addr %s207, 8
      %s209 = scalar_lea.vmem %s0, %s208
      %p210 = pneg %p37
      %p211 = pneg %p34
      %s212 = smul.u32 4, %s16
      %p213 = scmp.lt.s32.totalorder %s212, 7
      %s214 = scalar_select %p213, %s212, 7
      %s215 = smul.addr %s214, 8
      %s216 = scalar_lea.vmem %s1, %s215
      %p217 = pneg %p63
      %p218 = pneg %p60
      %p219 = pneg %p84
      %p220 = pneg %p81
      %p221 = pneg %p105
      %p222 = pneg %p102
      %p223 = pneg %p126
      %p224 = pneg %p123
      %p225 = pneg %p152
      %p226 = pneg %p149
      %s227 = smul.u32 4, %s16
      %p228 = scmp.lt.s32.totalorder %s227, 7
      %s229 = scalar_select %p228, %s227, 7
      %s230 = smul.addr %s229, 8
      %s231 = scalar_lea.vmem %s5, %s230
      %s232 = smul.u32 4, %s16
      %p233 = scmp.lt.s32.totalorder %s232, 7
      %s234 = scalar_select %p233, %s232, 7
      %s235 = smul.addr %s234, 8
      %s236 = scalar_lea.vmem %s0, %s235
      %s237 = smul.u32 4, %s16
      %s238 = smul.u32 4, %s16
      %p239 = scmp.lt.s32.totalorder %s238, 7
      %s240 = scalar_select %p239, %s238, 7
      %s241 = smul.addr %s240, 8
      %s242 = scalar_lea.vmem %s1, %s241
      %s243 = smul.u32 4, %s16
      %s244 = smul.u32 4, %s16
      %p245 = scmp.lt.s32.totalorder %s244, 7
      %s246 = scalar_select %p245, %s244, 7
      %s247 = smul.addr %s246, 8
      %s248 = scalar_lea.vmem %s5, %s247
      %s249 = smul.u32 4, %s16
      %v250 = vld [vmem:[%s236] sm:$0xff]
      %v251 = vld [vmem:[%s236 + $0x8] sm:$0xff]
      %v252 = vld [vmem:[%s236 + $0x10] sm:$0xff]
      %v253 = vld [vmem:[%s236 + $0x18] sm:$0xff]
      %v254 = vld [vmem:[%s2] sm:$0xff]
      %v255 = vld [vmem:[%s2 + $0x8] sm:$0xff]
      %v256 = vld [vmem:[%s242] sm:$0xff]
      %v257 = vld [vmem:[%s242 + $0x8] sm:$0xff]
      %v258 = vld [vmem:[%s242 + $0x10] sm:$0xff]
      %v259 = vld [vmem:[%s242 + $0x18] sm:$0xff]
      %v260 = vld [vmem:[%s3] sm:$0xff]
      %v261 = vld [vmem:[%s3 + $0x8] sm:$0xff]
      %v262 = vld [vmem:[%s3 + $0x10] sm:$0xff]
      %v263 = vld [vmem:[%s3 + $0x18] sm:$0xff]
      %v264 = vld [vmem:[%s3 + $0x20] sm:$0xff]
      %v265 = vld [vmem:[%s3 + $0x28] sm:$0xff]
      %v266 = vld [vmem:[%s3 + $0x30] sm:$0xff]
      %v267 = vld [vmem:[%s3 + $0x38] sm:$0xff]
      %v268 = vld [vmem:[%s3 + $0x40] sm:$0xff]
      %v269 = vld [vmem:[%s3 + $0x48] sm:$0xff]
      %v270 = vld [vmem:[%s3 + $0x50] sm:$0xff]
      %v271 = vld [vmem:[%s3 + $0x58] sm:$0xff]
      %v272 = vld [vmem:[%s3 + $0x60] sm:$0xff]
      %v273 = vld [vmem:[%s3 + $0x68] sm:$0xff]
      %v274 = vld [vmem:[%s3 + $0x70] sm:$0xff]
      %v275 = vld [vmem:[%s3 + $0x78] sm:$0xff]
      %276 = vmatprep.subr.mxu0 0.0
      %277 = vmatpush1.msra.mxu0 %v260
      %278 = vmatprep.subr.mxu0 0.0
      %279 = vmatpush1.msra.mxu0 %v261
      %280 = vmatprep.subr.mxu0 0.0
      %281 = vmatpush1.msra.mxu0 %v262
      %282 = vmatprep.subr.mxu0 0.0
      %283 = vmatpush1.msra.mxu0 %v263
      %284 = vmatprep.subr.mxu0 0.0
      %285 = vmatpush1.msra.mxu0 %v264
      %286 = vmatprep.subr.mxu0 0.0
      %287 = vmatpush1.msra.mxu0 %v265
      %288 = vmatprep.subr.mxu0 0.0
      %289 = vmatpush1.msra.mxu0 %v266
      %290 = vmatprep.subr.mxu0 0.0
      %291 = vmatpush1.msra.mxu0 %v267
      %292 = vmatprep.subr.mxu0 0.0
      %293 = vmatpush1.msra.mxu0 %v268
      %294 = vmatprep.subr.mxu0 0.0
      %295 = vmatpush1.msra.mxu0 %v269
      %296 = vmatprep.subr.mxu0 0.0
      %297 = vmatpush1.msra.mxu0 %v270
      %298 = vmatprep.subr.mxu0 0.0
      %299 = vmatpush1.msra.mxu0 %v271
      %300 = vmatprep.subr.mxu0 0.0
      %301 = vmatpush1.msra.mxu0 %v272
      %302 = vmatprep.subr.mxu0 0.0
      %303 = vmatpush1.msra.mxu0 %v273
      %304 = vmatprep.subr.mxu0 0.0
      %305 = vmatpush1.msra.mxu0 %v274
      %306 = vmatprep.subr.mxu0 0.0
      %307 = vmatpush1.msra.mxu0 %v275
      %308 = vmatprep.subr.mxu0 0.0
      %309 = vmatpush1.msra.mxu0 0.0
      %310 = vmatprep.subr.mxu0 0.0
      %311 = vmatpush1.msra.mxu0 0.0
      %312 = vmatprep.subr.mxu0 0.0
      %313 = vmatpush1.msra.mxu0 0.0
      %314 = vmatprep.subr.mxu0 0.0
      %315 = vmatpush1.msra.mxu0 0.0
      %316 = vmatprep.subr.mxu0 0.0
      %317 = vmatpush1.msra.mxu0 0.0
      %318 = vmatprep.subr.mxu0 0.0
      %319 = vmatpush1.msra.mxu0 0.0
      %320 = vmatprep.subr.mxu0 0.0
      %321 = vmatpush1.msra.mxu0 0.0
      %322 = vmatprep.subr.mxu0 0.0
      %323 = vmatpush1.msra.mxu0 0.0
      %324 = vmatprep.subr.mxu0 0.0
      %325 = vmatpush1.msra.mxu0 0.0
      %326 = vmatprep.subr.mxu0 0.0
      %327 = vmatpush1.msra.mxu0 0.0
      %328 = vmatprep.subr.mxu0 0.0
      %329 = vmatpush1.msra.mxu0 0.0
      %330 = vmatprep.subr.mxu0 0.0
      %331 = vmatpush1.msra.mxu0 0.0
      %332 = vmatprep.subr.mxu0 0.0
      %333 = vmatpush1.msra.mxu0 0.0
      %334 = vmatprep.subr.mxu0 0.0
      %335 = vmatpush1.msra.mxu0 0.0
      %336 = vmatprep.subr.mxu0 0.0
      %337 = vmatpush1.msra.mxu0 0.0
      %338 = vmatprep.subr.mxu0 0.0
      %339 = vmatpush1.msra.mxu0 0.0
      %340 = vmatprep.mubr.f32.mxu0 0.0
      %341 = vmatmul.mubr.f32.gmra.mrb[0].mxu0 %v256
      %v342 = vpop.f32.mrb[0].mxu0
      %v343 = vadd.f32 0.0, %v342
      %v344 = vpop.f32.mrb[0].mxu0
      %345 = vmatprep.mubr.f32.mxu0 0.0
      %346 = vmatmul.mubr.f32.gmra.mrb[0].mxu0 %v257
      %v347 = vpop.f32.mrb[0].mxu0
      %v348 = vadd.f32 0.0, %v347
      %v349 = vpop.f32.mrb[0].mxu0
      %350 = vmatprep.mubr.f32.mxu0 0.0
      %351 = vmatmul.mubr.f32.gmra.mrb[0].mxu0 %v258
      %v352 = vpop.f32.mrb[0].mxu0
      %v353 = vadd.f32 0.0, %v352
      %v354 = vpop.f32.mrb[0].mxu0
      %355 = vmatprep.mubr.f32.mxu0 0.0
      %356 = vmatmul.mubr.f32.gmra.mrb[0].mxu0 %v259
      %v357 = vpop.f32.mrb[0].mxu0
      %v358 = vadd.f32 0.0, %v357
      %v359 = vpop.f32.mrb[0].mxu0
      %360 = vdwg.mxu0
      %vm361 = vcmask 130048
      %v363 = vsel %vm361, %v250, 0
      %v366 = vsel %vm361, %v251, 0
      %v369 = vsel %vm361, %v252, 0
      %v372 = vsel %vm361, %v253, 0
      %374 = vmatprep.subr.mxu0 0.0
      %375 = vmatpush1.msra.mxu0 %v254
      %376 = vmatprep.subr.mxu0 0.0
      %377 = vmatpush1.msra.mxu0 %v255
      %378 = vmatprep.subr.mxu0 0.0
      %379 = vmatpush1.msra.mxu0 0.0
      %380 = vmatprep.subr.mxu0 0.0
      %381 = vmatpush1.msra.mxu0 0.0
      %382 = vmatprep.subr.mxu0 0.0
      %383 = vmatpush1.msra.mxu0 0.0
      %384 = vmatprep.subr.mxu0 0.0
      %385 = vmatpush1.msra.mxu0 0.0
      %386 = vmatprep.subr.mxu0 0.0
      %387 = vmatpush1.msra.mxu0 0.0
      %388 = vmatprep.subr.mxu0 0.0
      %389 = vmatpush1.msra.mxu0 0.0
      %390 = vmatprep.subr.mxu0 0.0
      %391 = vmatpush1.msra.mxu0 0.0
      %392 = vmatprep.subr.mxu0 0.0
      %393 = vmatpush1.msra.mxu0 0.0
      %394 = vmatprep.subr.mxu0 0.0
      %395 = vmatpush1.msra.mxu0 0.0
      %396 = vmatprep.subr.mxu0 0.0
      %397 = vmatpush1.msra.mxu0 0.0
      %398 = vmatprep.subr.mxu0 0.0
      %399 = vmatpush1.msra.mxu0 0.0
      %400 = vmatprep.subr.mxu0 0.0
      %401 = vmatpush1.msra.mxu0 0.0
      %402 = vmatprep.subr.mxu0 0.0
      %403 = vmatpush1.msra.mxu0 0.0
      %404 = vmatprep.subr.mxu0 0.0
      %405 = vmatpush1.msra.mxu0 0.0
      %406 = vmatprep.subr.mxu0 0.0
      %407 = vmatpush1.msra.mxu0 0.0
      %408 = vmatprep.subr.mxu0 0.0
      %409 = vmatpush1.msra.mxu0 0.0
      %410 = vmatprep.subr.mxu0 0.0
      %411 = vmatpush1.msra.mxu0 0.0
      %412 = vmatprep.subr.mxu0 0.0
      %413 = vmatpush1.msra.mxu0 0.0
      %414 = vmatprep.subr.mxu0 0.0
      %415 = vmatpush1.msra.mxu0 0.0
      %416 = vmatprep.subr.mxu0 0.0
      %417 = vmatpush1.msra.mxu0 0.0
      %418 = vmatprep.subr.mxu0 0.0
      %419 = vmatpush1.msra.mxu0 0.0
      %420 = vmatprep.subr.mxu0 0.0
      %421 = vmatpush1.msra.mxu0 0.0
      %422 = vmatprep.subr.mxu0 0.0
      %423 = vmatpush1.msra.mxu0 0.0
      %424 = vmatprep.subr.mxu0 0.0
      %425 = vmatpush1.msra.mxu0 0.0
      %426 = vmatprep.subr.mxu0 0.0
      %427 = vmatpush1.msra.mxu0 0.0
      %428 = vmatprep.subr.mxu0 0.0
      %429 = vmatpush1.msra.mxu0 0.0
      %430 = vmatprep.subr.mxu0 0.0
      %431 = vmatpush1.msra.mxu0 0.0
      %432 = vmatprep.subr.mxu0 0.0
      %433 = vmatpush1.msra.mxu0 0.0
      %434 = vmatprep.subr.mxu0 0.0
      %435 = vmatpush1.msra.mxu0 0.0
      %436 = vmatprep.subr.mxu0 0.0
      %437 = vmatpush1.msra.mxu0 0.0
      %438 = vmatprep.mubr.f32.mxu0 0.0
      %439 = vmatmul.mubr.f32.gmra.mrb[0].mxu0 %v363
      %v440 = vpop.f32.mrb[0].mxu0
      %v441 = vadd.f32 %v343, %v440
      %v442 = vpop.f32.mrb[0].mxu0
      %443 = vmatprep.mubr.f32.mxu0 0.0
      %444 = vmatmul.mubr.f32.gmra.mrb[0].mxu0 %v366
      %v445 = vpop.f32.mrb[0].mxu0
      %v446 = vadd.f32 %v348, %v445
      %v447 = vpop.f32.mrb[0].mxu0
      %448 = vmatprep.mubr.f32.mxu0 0.0
      %449 = vmatmul.mubr.f32.gmra.mrb[0].mxu0 %v369
      %v450 = vpop.f32.mrb[0].mxu0
      %v451 = vadd.f32 %v353, %v450
      %v452 = vpop.f32.mrb[0].mxu0
      %453 = vmatprep.mubr.f32.mxu0 0.0
      %454 = vmatmul.mubr.f32.gmra.mrb[0].mxu0 %v372
      %v455 = vpop.f32.mrb[0].mxu0
      %v456 = vadd.f32 %v358, %v455
      %v457 = vpop.f32.mrb[0].mxu0
      %458 = vdwg.mxu0
      %v459 = vld [vmem:[%s4] sm:$0x1]
      %v461 = vlaneseq
      %v462 = vshrl.u32 %v461, 7
      %v463 = vsub.s32 0, %v462
      %v464 = vrot.slane %v459, %v463
      %v466 = vadd.f32 %v441, %v464
      %v467 = vadd.f32 %v446, %v464
      %v468 = vadd.f32 %v451, %v464
      %v469 = vadd.f32 %v456, %v464
      %470 = vmax.xlane.f32.xlu0 %v466
      %v471 = vpop.xlane.xlu0 %470
      %472 = vmax.xlane.f32.xlu0 %v467
      %v473 = vpop.xlane.xlu0 %472
      %474 = vmax.xlane.f32.xlu0 %v468
      %v475 = vpop.xlane.xlu0 %474
      %476 = vmax.xlane.f32.xlu0 %v469
      %v477 = vpop.xlane.xlu0 %476
      %v478 = vsub.f32 %v466, %v471
      %v479 = vsub.f32 %v467, %v473
      %v480 = vsub.f32 %v468, %v475
      %v481 = vsub.f32 %v469, %v477
      %v482 = vmul.f32 %v478, 1.442695
      %v483 = vpow.pop %v482
      %v484 = vmul.f32 %v479, 1.442695
      %v485 = vpow.pop %v484
      %v486 = vmul.f32 %v480, 1.442695
      %v487 = vpow.pop %v486
      %v488 = vmul.f32 %v481, 1.442695
      %v489 = vpow.pop %v488
      %490 = vadd.xlane.f32.xlu0 %v483
      %v491 = vpop.xlane.xlu0 %490
      %492 = vadd.xlane.f32.xlu0 %v485
      %v493 = vpop.xlane.xlu0 %492
      %494 = vadd.xlane.f32.xlu0 %v487
      %v495 = vpop.xlane.xlu0 %494
      %496 = vadd.xlane.f32.xlu0 %v489
      %v497 = vpop.xlane.xlu0 %496
      %v498 = vlog2.pop %v491
      %v499 = vmul.f32 %v498, 0.6931472
      %v500 = vlog2.pop %v493
      %v501 = vmul.f32 %v500, 0.6931472
      %v502 = vlog2.pop %v495
      %v503 = vmul.f32 %v502, 0.6931472
      %v504 = vlog2.pop %v497
      %v505 = vmul.f32 %v504, 0.6931472
      %v506 = vsub.f32 %v478, %v499
      %v507 = vsub.f32 %v479, %v501
      %v508 = vsub.f32 %v480, %v503
      %v509 = vsub.f32 %v481, %v505
      %510 = vst [vmem:[%s248] sm:$0xff] %v506
      %511 = vst [vmem:[%s248 + $0x8] sm:$0xff] %v507
      %512 = vst [vmem:[%s248 + $0x10] sm:$0xff] %v508
      %513 = vst [vmem:[%s248 + $0x18] sm:$0xff] %v509
      %s514 = smul.u32 4, %s16
      %p515 = scmp.lt.s32.totalorder %s514, 7
      %s516 = scalar_select %p515, %s514, 7
      %s517 = smul.addr %s516, 8
      %s518 = scalar_lea.vmem %s5, %s517
      // Predicated region
      $region41: #{rnn_forward.3} parent=39 // pred_check
        %p519 = pneg %p149
      $region42: #{rnn_forward.3} parent=39 // pred_check_branch
        %521 = sbr.rel (%p519) target = $region44
      $region43: #{rnn_forward.3} parent=39 // pred_region
        %s522 = smul.u32 4, %s16
      $region44: #{rnn_forward.3} parent=39 // pred_fallthru
        _
    $region40: #{rnn_forward.3} parent=5 // pred_fallthru
      _
    %p523 = scmp.le.s32.totalorder 2, %s11
    // Predicated region
    $region45: #{rnn_forward.3} parent=5 // pred_check
      %p524 = pneg %p523
    $region46: #{rnn_forward.3} parent=5 // pred_check_branch
      %526 = sbr.rel (%p524) target = $region48
    $region47: #{rnn_forward.3} parent=5 // pred_region
      %s527 = ssub.s32 %s11, 2
      // Predicated region
      $region49: #{rnn_forward.3} parent=47 // pred_check
        %p528 = pneg %p155
      $region50: #{rnn_forward.3} parent=47 // pred_check_branch
        %530 = sbr.rel (%p528) target = $region52
      $region51: #{rnn_forward.3} parent=47 // pred_region
        %s531 = smul.u32 4, %s17
        %p532 = scmp.lt.s32.totalorder %s531, 7
        %s533 = scalar_select %p532, %s531, 7
        %s534 = smul.addr %s533, 8
        %s535 = scalar_lea.vmem %s5, %s534
      $region52: #{rnn_forward.3} parent=47 // pred_fallthru
        _
    $region48: #{rnn_forward.3} parent=5 // pred_fallthru
      _
  $region6: #{rnn_forward.3} parent=0 // loop_footer
    %s15 = sadd.s32 1, %s11
  $region7: #{rnn_forward.3} parent=0 // loop_footer_branch
    %10 = sbr.rel target = $region3
  $region8: #{rnn_forward.3} parent=0 // loop_exit
    _

// kernel: rnn_forward.2
$region0: #{rnn_forward.2}
  #allocation0 [shape = 'u32[]', space=smem, size = 0x4, offset = 0x4, fixed_abs, tag = 'smem constant byte address 0x4 - core index']
  #allocation1 [shape = 'u32[144,128]{1,0:T(1,128)}', space=vmem, size = 0x12000, scoped, tag = 'internal scratch']
  %s0 = inlined_call_operand.vmem [shape: f32[64,16], index: 0, kind: input, shape index: {}]
  %s1 = inlined_call_operand.vmem [shape: f32[8,128], index: 1, kind: input, shape index: {}]
  %s2 = inlined_call_operand.vmem [shape: f32[16,128], index: 2, kind: input, shape index: {}]
  %s3 = inlined_call_operand.hbm [shape: f32[128,128], index: 3, kind: input, shape index: {}]
  %s4 = inlined_call_operand.vmem [shape: f32[1,128], index: 4, kind: input, shape index: {}]
  %s5 = inlined_call_operand.vmem [shape: f32[64,128], index: 5, kind: output, shape index: {0}]
  %s6 = inlined_call_operand.vmem [shape: f32[8,128], index: 6, kind: output, shape index: {1}]
  %7 = xla_tuple %s5, %s6
  %s8 = sld [smem:[#allocation0]]
  $region69: #{rnn_forward.2} parent=0
    _
  %s10 = ssub.s32 1, %s8
  %s11 = scalar_select 0, %s10, %s8
  $region1: #{rnn_forward.2} parent=0
    #allocation2 [shape = 'u8[65536]{0}', space=vmem, size = 0x10000, scoped, tag = 'input window, operand 3, single buffered']
    #allocation3 [shape = 's32[2]{0}', space=sflag, size = 0x8, scoped, tag = 'scoped memory for rnn_forward.2']
    %12 = vsyncpa [#allocation3], 0
    loop: start=0, step=1, limit=4
    $region2: #{rnn_forward.2} parent=1 // loop_pre_header
      _
    $region3: #{rnn_forward.2} parent=1 // loop_header
      %s14 = sphi 0, %s18
      %p15 = scmp.ge.s32.totalorder %s14, 4
      %s24 = sphi 0, %s26
      %s27 = sphi 0, %s24
      %s28 = sphi 0, %s27
      %s44 = sphi 0, %s28
      %s48 = sphi 0, %s48
      %s50 = sphi 0, %s48
      %s51 = sphi 0, %s50
      %s65 = sphi 0, %s51
      %s69 = sphi 0, %s69
      %s71 = sphi 0, %s69
      %s72 = sphi 0, %s71
      %s86 = sphi 0, %s72
      %s90 = sphi 0, %s90
      %s92 = sphi 0, %s90
      %s93 = sphi 0, %s92
      %s107 = sphi 0, %s93
      %s111 = sphi 0, %s111
      %s113 = sphi 0, %s111
      %s114 = sphi 0, %s113
      %s128 = sphi 0, %s114
      %s134 = sphi 0, %s136
      %s137 = sphi 0, %s134
      %s138 = sphi 0, %s137
      %s154 = sphi 0, %s138
      %s158 = sphi 0, %s158
      %s160 = sphi 0, %s158
      %s161 = sphi 0, %s160
      %s175 = sphi 0, %s161
    $region4: #{rnn_forward.2} parent=1 // loop_header_branch
      %17 = sbr.rel (%p15) target = $region8
    $region5: #{rnn_forward.2} parent=1 // loop_body
      %s19 = ssub.s32 %s14, 1
      %s20 = ssub.s32 %s14, 2
      %s21 = sadd.s32 %s14, 1
      %s22 = ssub.s32 %s14, %s21
      %p23 = scmp.eq.s32.totalorder %s22, 0
      %s25 = sadd.s32 %s24, 1
      %s26 = scalar_select %p23, %s24, %s25
      %p29 = pneg %p23
      %p30 = scmp.eq.s32.totalorder %s14, 1
      %p31 = por %p29, %p30
      %p32 = scmp.ne.s32.totalorder %s24, %s27
      %p33 = scmp.eq.s32.totalorder %s14, 0
      %p34 = por %p32, %p33
      %p35 = scmp.ne.s32.totalorder %s24, %s27
      %p36 = scmp.eq.s32.totalorder %s19, 1
      %p37 = por %p35, %p36
      %p38 = scmp.ne.s32.totalorder %s27, %s28
      %p39 = scmp.eq.s32.totalorder %s19, 0
      %p40 = por %p38, %p39
      %p41 = scmp.ne.s32.totalorder %s27, %s28
      %p42 = scmp.eq.s32.totalorder %s20, 1
      %p43 = por %p41, %p42
      %p45 = scmp.ne.s32.totalorder %s28, %s44
      %p46 = scmp.eq.s32.totalorder %s20, 0
      %p47 = por %p45, %p46
      %s49 = sadd.s32 %s48, 1
      %p52 = scmp.eq.s32.totalorder %s14, 1
      %p53 = scmp.ne.s32.totalorder %s48, %s50
      %p54 = scmp.eq.s32.totalorder %s14, 0
      %p55 = por %p53, %p54
      %p56 = scmp.ne.s32.totalorder %s48, %s50
      %p57 = scmp.eq.s32.totalorder %s19, 1
      %p58 = por %p56, %p57
      %p59 = scmp.ne.s32.totalorder %s50, %s51
      %p60 = scmp.eq.s32.totalorder %s19, 0
      %p61 = por %p59, %p60
      %p62 = scmp.ne.s32.totalorder %s50, %s51
      %p63 = scmp.eq.s32.totalorder %s20, 1
      %p64 = por %p62, %p63
      %p66 = scmp.ne.s32.totalorder %s51, %s65
      %p67 = scmp.eq.s32.totalorder %s20, 0
      %p68 = por %p66, %p67
      %s70 = sadd.s32 %s69, 1
      %p73 = scmp.eq.s32.totalorder %s14, 1
      %p74 = scmp.ne.s32.totalorder %s69, %s71
      %p75 = scmp.eq.s32.totalorder %s14, 0
      %p76 = por %p74, %p75
      %p77 = scmp.ne.s32.totalorder %s69, %s71
      %p78 = scmp.eq.s32.totalorder %s19, 1
      %p79 = por %p77, %p78
      %p80 = scmp.ne.s32.totalorder %s71, %s72
      %p81 = scmp.eq.s32.totalorder %s19, 0
      %p82 = por %p80, %p81
      %p83 = scmp.ne.s32.totalorder %s71, %s72
      %p84 = scmp.eq.s32.totalorder %s20, 1
      %p85 = por %p83, %p84
      %p87 = scmp.ne.s32.totalorder %s72, %s86
      %p88 = scmp.eq.s32.totalorder %s20, 0
      %p89 = por %p87, %p88
      %s91 = sadd.s32 %s90, 1
      %p94 = scmp.eq.s32.totalorder %s14, 1
      %p95 = scmp.ne.s32.totalorder %s90, %s92
      %p96 = scmp.eq.s32.totalorder %s14, 0
      %p97 = por %p95, %p96
      %p98 = scmp.ne.s32.totalorder %s90, %s92
      %p99 = scmp.eq.s32.totalorder %s19, 1
      %p100 = por %p98, %p99
      %p101 = scmp.ne.s32.totalorder %s92, %s93
      %p102 = scmp.eq.s32.totalorder %s19, 0
      %p103 = por %p101, %p102
      %p104 = scmp.ne.s32.totalorder %s92, %s93
      %p105 = scmp.eq.s32.totalorder %s20, 1
      %p106 = por %p104, %p105
      %p108 = scmp.ne.s32.totalorder %s93, %s107
      %p109 = scmp.eq.s32.totalorder %s20, 0
      %p110 = por %p108, %p109
      %s112 = sadd.s32 %s111, 1
      %p115 = scmp.eq.s32.totalorder %s14, 1
      %p116 = scmp.ne.s32.totalorder %s111, %s113
      %p117 = scmp.eq.s32.totalorder %s14, 0
      %p118 = por %p116, %p117
      %p119 = scmp.ne.s32.totalorder %s111, %s113
      %p120 = scmp.eq.s32.totalorder %s19, 1
      %p121 = por %p119, %p120
      %p122 = scmp.ne.s32.totalorder %s113, %s114
      %p123 = scmp.eq.s32.totalorder %s19, 0
      %p124 = por %p122, %p123
      %p125 = scmp.ne.s32.totalorder %s113, %s114
      %p126 = scmp.eq.s32.totalorder %s20, 1
      %p127 = por %p125, %p126
      %p129 = scmp.ne.s32.totalorder %s114, %s128
      %p130 = scmp.eq.s32.totalorder %s20, 0
      %p131 = por %p129, %p130
      %s132 = ssub.s32 %s14, %s21
      %p133 = scmp.eq.s32.totalorder %s132, 0
      %s135 = sadd.s32 %s134, 1
      %s136 = scalar_select %p133, %s134, %s135
      %p139 = pneg %p133
      %p140 = scmp.eq.s32.totalorder %s14, 1
      %p141 = por %p139, %p140
      %p142 = scmp.ne.s32.totalorder %s134, %s137
      %p143 = scmp.eq.s32.totalorder %s14, 0
      %p144 = por %p142, %p143
      %p145 = scmp.ne.s32.totalorder %s134, %s137
      %p146 = scmp.eq.s32.totalorder %s19, 1
      %p147 = por %p145, %p146
      %p148 = scmp.ne.s32.totalorder %s137, %s138
      %p149 = scmp.eq.s32.totalorder %s19, 0
      %p150 = por %p148, %p149
      %p151 = scmp.ne.s32.totalorder %s137, %s138
      %p152 = scmp.eq.s32.totalorder %s20, 1
      %p153 = por %p151, %p152
      %p155 = scmp.ne.s32.totalorder %s138, %s154
      %p156 = scmp.eq.s32.totalorder %s20, 0
      %p157 = por %p155, %p156
      %s159 = sadd.s32 %s158, 1
      %p162 = scmp.eq.s32.totalorder %s14, 1
      %p163 = scmp.ne.s32.totalorder %s158, %s160
      %p164 = scmp.eq.s32.totalorder %s14, 0
      %p165 = por %p163, %p164
      %p166 = scmp.ne.s32.totalorder %s158, %s160
      %p167 = scmp.eq.s32.totalorder %s19, 1
      %p168 = por %p166, %p167
      %p169 = scmp.ne.s32.totalorder %s160, %s161
      %p170 = scmp.eq.s32.totalorder %s19, 0
      %p171 = por %p169, %p170
      %p172 = scmp.ne.s32.totalorder %s160, %s161
      %p173 = scmp.eq.s32.totalorder %s20, 1
      %p174 = por %p172, %p173
      %p176 = scmp.ne.s32.totalorder %s161, %s175
      %p177 = scmp.eq.s32.totalorder %s20, 0
      %p178 = por %p176, %p177
      %p179 = scmp.le.s32.totalorder 1, %s14
      %p180 = scmp.lt.s32.totalorder %s14, 3
      %p181 = pnand %p179, %p180
      %p182 = pneg %p181
      // Predicated region
      $region9: #{rnn_forward.2} parent=5 // pred_check
        _
      $region10: #{rnn_forward.2} parent=5 // pred_check_branch
        %184 = sbr.rel (%p181) target = $region12
      $region11: #{rnn_forward.2} parent=5 // pred_region
        %s185 = ssub.s32 %s14, 1
        // Predicated region
        $region13: #{rnn_forward.2} parent=11 // pred_check
          %p186 = pneg %p61
        $region14: #{rnn_forward.2} parent=11 // pred_check_branch
          %188 = sbr.rel (%p186) target = $region16
        $region15: #{rnn_forward.2} parent=11 // pred_region
          _
        $region16: #{rnn_forward.2} parent=11 // pred_fallthru
          _
        // Predicated region
        $region17: #{rnn_forward.2} parent=11 // pred_check
          %p189 = pneg %p82
        $region18: #{rnn_forward.2} parent=11 // pred_check_branch
          %191 = sbr.rel (%p189) target = $region20
        $region19: #{rnn_forward.2} parent=11 // pred_region
          _
        $region20: #{rnn_forward.2} parent=11 // pred_fallthru
          _
        // Predicated region
        $region21: #{rnn_forward.2} parent=11 // pred_check
          %p192 = pneg %p103
        $region22: #{rnn_forward.2} parent=11 // pred_check_branch
          %194 = sbr.rel (%p192) target = $region24
        $region23: #{rnn_forward.2} parent=11 // pred_region
          %s196 = ssub.s32 2048, 2048
          %197 = vsyncadd [#allocation3], %s196
          %s198 = sshll.u32 [#allocation2], 4
          %s199 = int_to_ptr.vmem [resolvable:$true] %s198
          %204 = dma.hbm_to_vmem [thread:$0]  %s3, 2048, %s199, [#allocation3], 128, 128, 8
        $region24: #{rnn_forward.2} parent=11 // pred_fallthru
          _
        // Predicated region
        $region25: #{rnn_forward.2} parent=11 // pred_check
          %p205 = pneg %p124
        $region26: #{rnn_forward.2} parent=11 // pred_check_branch
          %207 = sbr.rel (%p205) target = $region28
        $region27: #{rnn_forward.2} parent=11 // pred_region
          _
        $region28: #{rnn_forward.2} parent=11 // pred_fallthru
          _
      $region12: #{rnn_forward.2} parent=5 // pred_fallthru
        _
      %p208 = scmp.lt.s32.totalorder %s14, 2
      // Predicated region
      $region29: #{rnn_forward.2} parent=5 // pred_check
        %p209 = pneg %p208
      $region30: #{rnn_forward.2} parent=5 // pred_check_branch
        %211 = sbr.rel (%p209) target = $region32
      $region31: #{rnn_forward.2} parent=5 // pred_region
        // Predicated region
        $region33: #{rnn_forward.2} parent=31 // pred_check
          %p212 = pneg %p34
        $region34: #{rnn_forward.2} parent=31 // pred_check_branch
          %214 = sbr.rel (%p212) target = $region36
        $region35: #{rnn_forward.2} parent=31 // pred_region
          %s215 = smul.u32 4, %s14
          %p216 = scmp.lt.s32.totalorder %s215, 7
          %s217 = scalar_select %p216, %s215, 7
          %s218 = smul.addr %s217, 8
          %s219 = scalar_lea.vmem %s0, %s218
          %s220 = smul.u32 4, %s14
        $region36: #{rnn_forward.2} parent=31 // pred_fallthru
          _
      $region32: #{rnn_forward.2} parent=5 // pred_fallthru
        _
      %p221 = scmp.le.s32.totalorder 1, %s14
      %p222 = scmp.lt.s32.totalorder %s14, 3
      %p223 = pnand %p221, %p222
      %p224 = pneg %p223
      // Predicated region
      $region37: #{rnn_forward.2} parent=5 // pred_check
        _
      $region38: #{rnn_forward.2} parent=5 // pred_check_branch
        %226 = sbr.rel (%p223) target = $region40
      $region39: #{rnn_forward.2} parent=5 // pred_region
        %s227 = ssub.s32 %s14, 1
        // Predicated region
        $region41: #{rnn_forward.2} parent=39 // pred_check
          %p228 = pneg %p103
        $region42: #{rnn_forward.2} parent=39 // pred_check_branch
          %230 = sbr.rel (%p228) target = $region44
        $region43: #{rnn_forward.2} parent=39 // pred_region
          %231 = dma.done [#allocation3], 2048
        $region44: #{rnn_forward.2} parent=39 // pred_fallthru
          _
        %s232 = smul.u32 4, %s19
        %p233 = scmp.lt.s32.totalorder %s232, 7
        %s234 = scalar_select %p233, %s232, 7
        %s235 = smul.addr %s234, 8
        %s236 = scalar_lea.vmem %s0, %s235
        %p237 = pneg %p40
        %p238 = pneg %p37
        %p239 = pneg %p61
        %p240 = pneg %p58
        %p241 = pneg %p82
        %p242 = pneg %p79
        %p243 = pneg %p103
        %p244 = pneg %p100
        %p245 = pneg %p124
        %p246 = pneg %p121
        %p247 = pneg %p150
        %p248 = pneg %p147
        %s249 = smul.u32 4, %s19
        %p250 = scmp.lt.s32.totalorder %s249, 7
        %s251 = scalar_select %p250, %s249, 7
        %s252 = smul.addr %s251, 8
        %s253 = scalar_lea.vmem %s5, %s252
        %p254 = pneg %p171
        %p255 = pneg %p168
        %s256 = smul.u32 4, %s19
        %p257 = scmp.lt.s32.totalorder %s256, 7
        %s258 = scalar_select %p257, %s256, 7
        %s259 = smul.addr %s258, 8
        %s260 = scalar_lea.vmem %s0, %s259
        %s261 = smul.u32 4, %s19
        %s262 = smul.u32 4, %s19
        %p263 = scmp.lt.s32.totalorder %s262, 7
        %s264 = scalar_select %p263, %s262, 7
        %s265 = smul.addr %s264, 8
        %s266 = scalar_lea.vmem %s5, %s265
        %s267 = smul.u32 4, %s19
        %p268 = scmp.eq.s32.totalorder %s19, 0
        // Predicated region
        $region45: #{rnn_forward.2} parent=39 // pred_check
          %p269 = pneg %p268
        $region46: #{rnn_forward.2} parent=39 // pred_check_branch
          %271 = sbr.rel (%p269) target = $region48
        $region47: #{rnn_forward.2} parent=39 // pred_region
          %v272 = vld [vmem:[%s1] sm:$0xff]
          %273 = vst [vmem:[%s6] sm:$0xff] %v272
        $region48: #{rnn_forward.2} parent=39 // pred_fallthru
          _
        %v274 = vld [vmem:[%s260] sm:$0xff]
        %v275 = vld [vmem:[%s260 + $0x8] sm:$0xff]
        %v276 = vld [vmem:[%s260 + $0x10] sm:$0xff]
        %v277 = vld [vmem:[%s260 + $0x18] sm:$0xff]
        %v278 = vld [vmem:[%s2] sm:$0xff]
        %v279 = vld [vmem:[%s2 + $0x8] sm:$0xff]
        %v280 = vld [vmem:[%s4] sm:$0x1]
        %v282 = vlaneseq
        %v283 = vshrl.u32 %v282, 7
        %v284 = vsub.s32 0, %v283
        %v285 = vrot.slane %v280, %v284
        %vm287 = vcmask 130048
        %v289 = vsel %vm287, %v274, 0
        %v292 = vsel %vm287, %v275, 0
        %v295 = vsel %vm287, %v276, 0
        %v298 = vsel %vm287, %v277, 0
        %300 = vmatprep.subr.mxu0 0.0
        %301 = vmatpush1.msra.mxu0 %v278
        %302 = vmatprep.subr.mxu0 0.0
        %303 = vmatpush1.msra.mxu0 %v279
        %304 = vmatprep.subr.mxu0 0.0
        %305 = vmatpush1.msra.mxu0 0.0
        %306 = vmatprep.subr.mxu0 0.0
        %307 = vmatpush1.msra.mxu0 0.0
        %308 = vmatprep.subr.mxu0 0.0
        %309 = vmatpush1.msra.mxu0 0.0
        %310 = vmatprep.subr.mxu0 0.0
        %311 = vmatpush1.msra.mxu0 0.0
        %312 = vmatprep.subr.mxu0 0.0
        %313 = vmatpush1.msra.mxu0 0.0
        %314 = vmatprep.subr.mxu0 0.0
        %315 = vmatpush1.msra.mxu0 0.0
        %316 = vmatprep.subr.mxu0 0.0
        %317 = vmatpush1.msra.mxu0 0.0
        %318 = vmatprep.subr.mxu0 0.0
        %319 = vmatpush1.msra.mxu0 0.0
        %320 = vmatprep.subr.mxu0 0.0
        %321 = vmatpush1.msra.mxu0 0.0
        %322 = vmatprep.subr.mxu0 0.0
        %323 = vmatpush1.msra.mxu0 0.0
        %324 = vmatprep.subr.mxu0 0.0
        %325 = vmatpush1.msra.mxu0 0.0
        %326 = vmatprep.subr.mxu0 0.0
        %327 = vmatpush1.msra.mxu0 0.0
        %328 = vmatprep.subr.mxu0 0.0
        %329 = vmatpush1.msra.mxu0 0.0
        %330 = vmatprep.subr.mxu0 0.0
        %331 = vmatpush1.msra.mxu0 0.0
        %332 = vmatprep.subr.mxu0 0.0
        %333 = vmatpush1.msra.mxu0 0.0
        %334 = vmatprep.subr.mxu0 0.0
        %335 = vmatpush1.msra.mxu0 0.0
        %336 = vmatprep.subr.mxu0 0.0
        %337 = vmatpush1.msra.mxu0 0.0
        %338 = vmatprep.subr.mxu0 0.0
        %339 = vmatpush1.msra.mxu0 0.0
        %340 = vmatprep.subr.mxu0 0.0
        %341 = vmatpush1.msra.mxu0 0.0
        %342 = vmatprep.subr.mxu0 0.0
        %343 = vmatpush1.msra.mxu0 0.0
        %344 = vmatprep.subr.mxu0 0.0
        %345 = vmatpush1.msra.mxu0 0.0
        %346 = vmatprep.subr.mxu0 0.0
        %347 = vmatpush1.msra.mxu0 0.0
        %348 = vmatprep.subr.mxu0 0.0
        %349 = vmatpush1.msra.mxu0 0.0
        %350 = vmatprep.subr.mxu0 0.0
        %351 = vmatpush1.msra.mxu0 0.0
        %352 = vmatprep.subr.mxu0 0.0
        %353 = vmatpush1.msra.mxu0 0.0
        %354 = vmatprep.subr.mxu0 0.0
        %355 = vmatpush1.msra.mxu0 0.0
        %356 = vmatprep.subr.mxu0 0.0
        %357 = vmatpush1.msra.mxu0 0.0
        %358 = vmatprep.subr.mxu0 0.0
        %359 = vmatpush1.msra.mxu0 0.0
        %360 = vmatprep.subr.mxu0 0.0
        %361 = vmatpush1.msra.mxu0 0.0
        %362 = vmatprep.subr.mxu0 0.0
        %363 = vmatpush1.msra.mxu0 0.0
        %364 = vmatprep.mubr.f32.mxu0 0.0
        %365 = vmatmul.mubr.f32.gmra.mrb[0].mxu0 %v289
        %v366 = vpop.f32.mrb[0].mxu0
        %v367 = vadd.f32 %v285, %v366
        %v368 = vpop.f32.mrb[0].mxu0
        %369 = vmatprep.mubr.f32.mxu0 0.0
        %370 = vmatmul.mubr.f32.gmra.mrb[0].mxu0 %v292
        %v371 = vpop.f32.mrb[0].mxu0
        %v372 = vadd.f32 %v285, %v371
        %v373 = vpop.f32.mrb[0].mxu0
        %374 = vmatprep.mubr.f32.mxu0 0.0
        %375 = vmatmul.mubr.f32.gmra.mrb[0].mxu0 %v295
        %v376 = vpop.f32.mrb[0].mxu0
        %v377 = vadd.f32 %v285, %v376
        %v378 = vpop.f32.mrb[0].mxu0
        %379 = vmatprep.mubr.f32.mxu0 0.0
        %380 = vmatmul.mubr.f32.gmra.mrb[0].mxu0 %v298
        %v381 = vpop.f32.mrb[0].mxu0
        %v382 = vadd.f32 %v285, %v381
        %v383 = vpop.f32.mrb[0].mxu0
        %384 = vdwg.mxu0
        %v385 = vld [vmem:[#allocation2] sm:$0xff]
        %v386 = vld [vmem:[#allocation2 + $0x8] sm:$0xff]
        %v387 = vld [vmem:[#allocation2 + $0x10] sm:$0xff]
        %v388 = vld [vmem:[#allocation2 + $0x18] sm:$0xff]
        %v389 = vld [vmem:[#allocation2 + $0x20] sm:$0xff]
        %v390 = vld [vmem:[#allocation2 + $0x28] sm:$0xff]
        %v391 = vld [vmem:[#allocation2 + $0x30] sm:$0xff]
        %v392 = vld [vmem:[#allocation2 + $0x38] sm:$0xff]
        %v393 = vld [vmem:[#allocation2 + $0x40] sm:$0xff]
        %v394 = vld [vmem:[#allocation2 + $0x48] sm:$0xff]
        %v395 = vld [vmem:[#allocation2 + $0x50] sm:$0xff]
        %v396 = vld [vmem:[#allocation2 + $0x58] sm:$0xff]
        %v397 = vld [vmem:[#allocation2 + $0x60] sm:$0xff]
        %v398 = vld [vmem:[#allocation2 + $0x68] sm:$0xff]
        %v399 = vld [vmem:[#allocation2 + $0x70] sm:$0xff]
        %v400 = vld [vmem:[#allocation2 + $0x78] sm:$0xff]
        %v401 = vld [vmem:[%s6] sm:$0xff]
        %402 = vst [vmem:[%s266] sm:$0xff] %v401
        %403 = vmatprep.subr.mxu0 0.0
        %404 = vmatpush1.msra.mxu0 %v385
        %405 = vmatprep.subr.mxu0 0.0
        %406 = vmatpush1.msra.mxu0 %v386
        %407 = vmatprep.subr.mxu0 0.0
        %408 = vmatpush1.msra.mxu0 %v387
        %409 = vmatprep.subr.mxu0 0.0
        %410 = vmatpush1.msra.mxu0 %v388
        %411 = vmatprep.subr.mxu0 0.0
        %412 = vmatpush1.msra.mxu0 %v389
        %413 = vmatprep.subr.mxu0 0.0
        %414 = vmatpush1.msra.mxu0 %v390
        %415 = vmatprep.subr.mxu0 0.0
        %416 = vmatpush1.msra.mxu0 %v391
        %417 = vmatprep.subr.mxu0 0.0
        %418 = vmatpush1.msra.mxu0 %v392
        %419 = vmatprep.subr.mxu0 0.0
        %420 = vmatpush1.msra.mxu0 %v393
        %421 = vmatprep.subr.mxu0 0.0
        %422 = vmatpush1.msra.mxu0 %v394
        %423 = vmatprep.subr.mxu0 0.0
        %424 = vmatpush1.msra.mxu0 %v395
        %425 = vmatprep.subr.mxu0 0.0
        %426 = vmatpush1.msra.mxu0 %v396
        %427 = vmatprep.subr.mxu0 0.0
        %428 = vmatpush1.msra.mxu0 %v397
        %429 = vmatprep.subr.mxu0 0.0
        %430 = vmatpush1.msra.mxu0 %v398
        %431 = vmatprep.subr.mxu0 0.0
        %432 = vmatpush1.msra.mxu0 %v399
        %433 = vmatprep.subr.mxu0 0.0
        %434 = vmatpush1.msra.mxu0 %v400
        %435 = vmatprep.subr.mxu0 0.0
        %436 = vmatpush1.msra.mxu0 0.0
        %437 = vmatprep.subr.mxu0 0.0
        %438 = vmatpush1.msra.mxu0 0.0
        %439 = vmatprep.subr.mxu0 0.0
        %440 = vmatpush1.msra.mxu0 0.0
        %441 = vmatprep.subr.mxu0 0.0
        %442 = vmatpush1.msra.mxu0 0.0
        %443 = vmatprep.subr.mxu0 0.0
        %444 = vmatpush1.msra.mxu0 0.0
        %445 = vmatprep.subr.mxu0 0.0
        %446 = vmatpush1.msra.mxu0 0.0
        %447 = vmatprep.subr.mxu0 0.0
        %448 = vmatpush1.msra.mxu0 0.0
        %449 = vmatprep.subr.mxu0 0.0
        %450 = vmatpush1.msra.mxu0 0.0
        %451 = vmatprep.subr.mxu0 0.0
        %452 = vmatpush1.msra.mxu0 0.0
        %453 = vmatprep.subr.mxu0 0.0
        %454 = vmatpush1.msra.mxu0 0.0
        %455 = vmatprep.subr.mxu0 0.0
        %456 = vmatpush1.msra.mxu0 0.0
        %457 = vmatprep.subr.mxu0 0.0
        %458 = vmatpush1.msra.mxu0 0.0
        %459 = vmatprep.subr.mxu0 0.0
        %460 = vmatpush1.msra.mxu0 0.0
        %461 = vmatprep.subr.mxu0 0.0
        %462 = vmatpush1.msra.mxu0 0.0
        %463 = vmatprep.subr.mxu0 0.0
        %464 = vmatpush1.msra.mxu0 0.0
        %465 = vmatprep.subr.mxu0 0.0
        %466 = vmatpush1.msra.mxu0 0.0
        %467 = vmatprep.mubr.f32.mxu0 0.0
        %468 = vmatmul.mubr.f32.gmra.mrb[0].mxu0 %v401
        %v469 = vpop.f32.mrb[0].mxu0
        %v470 = vadd.f32 0.0, %v469
        %v471 = vpop.f32.mrb[0].mxu0
        %472 = vdwg.mxu0
        %v473 = vadd.f32 %v367, %v470
        %474 = vst [vmem:[%s266 + $0x8] sm:$0xff] %v473
        %475 = vmatprep.subr.mxu0 0.0
        %476 = vmatpush1.msra.mxu0 %v385
        %477 = vmatprep.subr.mxu0 0.0
        %478 = vmatpush1.msra.mxu0 %v386
        %479 = vmatprep.subr.mxu0 0.0
        %480 = vmatpush1.msra.mxu0 %v387
        %481 = vmatprep.subr.mxu0 0.0
        %482 = vmatpush1.msra.mxu0 %v388
        %483 = vmatprep.subr.mxu0 0.0
        %484 = vmatpush1.msra.mxu0 %v389
        %485 = vmatprep.subr.mxu0 0.0
        %486 = vmatpush1.msra.mxu0 %v390
        %487 = vmatprep.subr.mxu0 0.0
        %488 = vmatpush1.msra.mxu0 %v391
        %489 = vmatprep.subr.mxu0 0.0
        %490 = vmatpush1.msra.mxu0 %v392
        %491 = vmatprep.subr.mxu0 0.0
        %492 = vmatpush1.msra.mxu0 %v393
        %493 = vmatprep.subr.mxu0 0.0
        %494 = vmatpush1.msra.mxu0 %v394
        %495 = vmatprep.subr.mxu0 0.0
        %496 = vmatpush1.msra.mxu0 %v395
        %497 = vmatprep.subr.mxu0 0.0
        %498 = vmatpush1.msra.mxu0 %v396
        %499 = vmatprep.subr.mxu0 0.0
        %500 = vmatpush1.msra.mxu0 %v397
        %501 = vmatprep.subr.mxu0 0.0
        %502 = vmatpush1.msra.mxu0 %v398
        %503 = vmatprep.subr.mxu0 0.0
        %504 = vmatpush1.msra.mxu0 %v399
        %505 = vmatprep.subr.mxu0 0.0
        %506 = vmatpush1.msra.mxu0 %v400
        %507 = vmatprep.subr.mxu0 0.0
        %508 = vmatpush1.msra.mxu0 0.0
        %509 = vmatprep.subr.mxu0 0.0
        %510 = vmatpush1.msra.mxu0 0.0
        %511 = vmatprep.subr.mxu0 0.0
        %512 = vmatpush1.msra.mxu0 0.0
        %513 = vmatprep.subr.mxu0 0.0
        %514 = vmatpush1.msra.mxu0 0.0
        %515 = vmatprep.subr.mxu0 0.0
        %516 = vmatpush1.msra.mxu0 0.0
        %517 = vmatprep.subr.mxu0 0.0
        %518 = vmatpush1.msra.mxu0 0.0
        %519 = vmatprep.subr.mxu0 0.0
        %520 = vmatpush1.msra.mxu0 0.0
        %521 = vmatprep.subr.mxu0 0.0
        %522 = vmatpush1.msra.mxu0 0.0
        %523 = vmatprep.subr.mxu0 0.0
        %524 = vmatpush1.msra.mxu0 0.0
        %525 = vmatprep.subr.mxu0 0.0
        %526 = vmatpush1.msra.mxu0 0.0
        %527 = vmatprep.subr.mxu0 0.0
        %528 = vmatpush1.msra.mxu0 0.0
        %529 = vmatprep.subr.mxu0 0.0
        %530 = vmatpush1.msra.mxu0 0.0
        %531 = vmatprep.subr.mxu0 0.0
        %532 = vmatpush1.msra.mxu0 0.0
        %533 = vmatprep.subr.mxu0 0.0
        %534 = vmatpush1.msra.mxu0 0.0
        %535 = vmatprep.subr.mxu0 0.0
        %536 = vmatpush1.msra.mxu0 0.0
        %537 = vmatprep.subr.mxu0 0.0
        %538 = vmatpush1.msra.mxu0 0.0
        %539 = vmatprep.mubr.f32.mxu0 0.0
        %540 = vmatmul.mubr.f32.gmra.mrb[0].mxu0 %v473
        %v541 = vpop.f32.mrb[0].mxu0
        %v542 = vadd.f32 0.0, %v541
        %v543 = vpop.f32.mrb[0].mxu0
        %544 = vdwg.mxu0
        %v545 = vadd.f32 %v372, %v542
        %546 = vst [vmem:[%s266 + $0x10] sm:$0xff] %v545
        %547 = vmatprep.subr.mxu0 0.0
        %548 = vmatpush1.msra.mxu0 %v385
        %549 = vmatprep.subr.mxu0 0.0
        %550 = vmatpush1.msra.mxu0 %v386
        %551 = vmatprep.subr.mxu0 0.0
        %552 = vmatpush1.msra.mxu0 %v387
        %553 = vmatprep.subr.mxu0 0.0
        %554 = vmatpush1.msra.mxu0 %v388
        %555 = vmatprep.subr.mxu0 0.0
        %556 = vmatpush1.msra.mxu0 %v389
        %557 = vmatprep.subr.mxu0 0.0
        %558 = vmatpush1.msra.mxu0 %v390
        %559 = vmatprep.subr.mxu0 0.0
        %560 = vmatpush1.msra.mxu0 %v391
        %561 = vmatprep.subr.mxu0 0.0
        %562 = vmatpush1.msra.mxu0 %v392
        %563 = vmatprep.subr.mxu0 0.0
        %564 = vmatpush1.msra.mxu0 %v393
        %565 = vmatprep.subr.mxu0 0.0
        %566 = vmatpush1.msra.mxu0 %v394
        %567 = vmatprep.subr.mxu0 0.0
        %568 = vmatpush1.msra.mxu0 %v395
        %569 = vmatprep.subr.mxu0 0.0
        %570 = vmatpush1.msra.mxu0 %v396
        %571 = vmatprep.subr.mxu0 0.0
        %572 = vmatpush1.msra.mxu0 %v397
        %573 = vmatprep.subr.mxu0 0.0
        %574 = vmatpush1.msra.mxu0 %v398
        %575 = vmatprep.subr.mxu0 0.0
        %576 = vmatpush1.msra.mxu0 %v399
        %577 = vmatprep.subr.mxu0 0.0
        %578 = vmatpush1.msra.mxu0 %v400
        %579 = vmatprep.subr.mxu0 0.0
        %580 = vmatpush1.msra.mxu0 0.0
        %581 = vmatprep.subr.mxu0 0.0
        %582 = vmatpush1.msra.mxu0 0.0
        %583 = vmatprep.subr.mxu0 0.0
        %584 = vmatpush1.msra.mxu0 0.0
        %585 = vmatprep.subr.mxu0 0.0
        %586 = vmatpush1.msra.mxu0 0.0
        %587 = vmatprep.subr.mxu0 0.0
        %588 = vmatpush1.msra.mxu0 0.0
        %589 = vmatprep.subr.mxu0 0.0
        %590 = vmatpush1.msra.mxu0 0.0
        %591 = vmatprep.subr.mxu0 0.0
        %592 = vmatpush1.msra.mxu0 0.0
        %593 = vmatprep.subr.mxu0 0.0
        %594 = vmatpush1.msra.mxu0 0.0
        %595 = vmatprep.subr.mxu0 0.0
        %596 = vmatpush1.msra.mxu0 0.0
        %597 = vmatprep.subr.mxu0 0.0
        %598 = vmatpush1.msra.mxu0 0.0
        %599 = vmatprep.subr.mxu0 0.0
        %600 = vmatpush1.msra.mxu0 0.0
        %601 = vmatprep.subr.mxu0 0.0
        %602 = vmatpush1.msra.mxu0 0.0
        %603 = vmatprep.subr.mxu0 0.0
        %604 = vmatpush1.msra.mxu0 0.0
        %605 = vmatprep.subr.mxu0 0.0
        %606 = vmatpush1.msra.mxu0 0.0
        %607 = vmatprep.subr.mxu0 0.0
        %608 = vmatpush1.msra.mxu0 0.0
        %609 = vmatprep.subr.mxu0 0.0
        %610 = vmatpush1.msra.mxu0 0.0
        %611 = vmatprep.mubr.f32.mxu0 0.0
        %612 = vmatmul.mubr.f32.gmra.mrb[0].mxu0 %v545
        %v613 = vpop.f32.mrb[0].mxu0
        %v614 = vadd.f32 0.0, %v613
        %v615 = vpop.f32.mrb[0].mxu0
        %616 = vdwg.mxu0
        %v617 = vadd.f32 %v377, %v614
        %618 = vst [vmem:[%s266 + $0x18] sm:$0xff] %v617
        %619 = vmatprep.subr.mxu0 0.0
        %620 = vmatpush1.msra.mxu0 %v385
        %621 = vmatprep.subr.mxu0 0.0
        %622 = vmatpush1.msra.mxu0 %v386
        %623 = vmatprep.subr.mxu0 0.0
        %624 = vmatpush1.msra.mxu0 %v387
        %625 = vmatprep.subr.mxu0 0.0
        %626 = vmatpush1.msra.mxu0 %v388
        %627 = vmatprep.subr.mxu0 0.0
        %628 = vmatpush1.msra.mxu0 %v389
        %629 = vmatprep.subr.mxu0 0.0
        %630 = vmatpush1.msra.mxu0 %v390
        %631 = vmatprep.subr.mxu0 0.0
        %632 = vmatpush1.msra.mxu0 %v391
        %633 = vmatprep.subr.mxu0 0.0
        %634 = vmatpush1.msra.mxu0 %v392
        %635 = vmatprep.subr.mxu0 0.0
        %636 = vmatpush1.msra.mxu0 %v393
        %637 = vmatprep.subr.mxu0 0.0
        %638 = vmatpush1.msra.mxu0 %v394
        %639 = vmatprep.subr.mxu0 0.0
        %640 = vmatpush1.msra.mxu0 %v395
        %641 = vmatprep.subr.mxu0 0.0
        %642 = vmatpush1.msra.mxu0 %v396
        %643 = vmatprep.subr.mxu0 0.0
        %644 = vmatpush1.msra.mxu0 %v397
        %645 = vmatprep.subr.mxu0 0.0
        %646 = vmatpush1.msra.mxu0 %v398
        %647 = vmatprep.subr.mxu0 0.0
        %648 = vmatpush1.msra.mxu0 %v399
        %649 = vmatprep.subr.mxu0 0.0
        %650 = vmatpush1.msra.mxu0 %v400
        %651 = vmatprep.subr.mxu0 0.0
        %652 = vmatpush1.msra.mxu0 0.0
        %653 = vmatprep.subr.mxu0 0.0
        %654 = vmatpush1.msra.mxu0 0.0
        %655 = vmatprep.subr.mxu0 0.0
        %656 = vmatpush1.msra.mxu0 0.0
        %657 = vmatprep.subr.mxu0 0.0
        %658 = vmatpush1.msra.mxu0 0.0
        %659 = vmatprep.subr.mxu0 0.0
        %660 = vmatpush1.msra.mxu0 0.0
        %661 = vmatprep.subr.mxu0 0.0
        %662 = vmatpush1.msra.mxu0 0.0
        %663 = vmatprep.subr.mxu0 0.0
        %664 = vmatpush1.msra.mxu0 0.0
        %665 = vmatprep.subr.mxu0 0.0
        %666 = vmatpush1.msra.mxu0 0.0
        %667 = vmatprep.subr.mxu0 0.0
        %668 = vmatpush1.msra.mxu0 0.0
        %669 = vmatprep.subr.mxu0 0.0
        %670 = vmatpush1.msra.mxu0 0.0
        %671 = vmatprep.subr.mxu0 0.0
        %672 = vmatpush1.msra.mxu0 0.0
        %673 = vmatprep.subr.mxu0 0.0
        %674 = vmatpush1.msra.mxu0 0.0
        %675 = vmatprep.subr.mxu0 0.0
        %676 = vmatpush1.msra.mxu0 0.0
        %677 = vmatprep.subr.mxu0 0.0
        %678 = vmatpush1.msra.mxu0 0.0
        %679 = vmatprep.subr.mxu0 0.0
        %680 = vmatpush1.msra.mxu0 0.0
        %681 = vmatprep.subr.mxu0 0.0
        %682 = vmatpush1.msra.mxu0 0.0
        %683 = vmatprep.mubr.f32.mxu0 0.0
        %684 = vmatmul.mubr.f32.gmra.mrb[0].mxu0 %v617
        %v685 = vpop.f32.mrb[0].mxu0
        %v686 = vadd.f32 0.0, %v685
        %v687 = vpop.f32.mrb[0].mxu0
        %688 = vdwg.mxu0
        %v689 = vadd.f32 %v382, %v686
        %690 = vst [vmem:[%s6] sm:$0xff] %v689
        %s691 = smul.u32 4, %s19
        %p692 = scmp.lt.s32.totalorder %s691, 7
        %s693 = scalar_select %p692, %s691, 7
        %s694 = smul.addr %s693, 8
        %s695 = scalar_lea.vmem %s5, %s694
        // Predicated region
        $region49: #{rnn_forward.2} parent=39 // pred_check
          %p696 = pneg %p147
        $region50: #{rnn_forward.2} parent=39 // pred_check_branch
          %698 = sbr.rel (%p696) target = $region52
        $region51: #{rnn_forward.2} parent=39 // pred_region
          %s699 = smul.u32 4, %s19
        $region52: #{rnn_forward.2} parent=39 // pred_fallthru
          _
        // Predicated region
        $region53: #{rnn_forward.2} parent=39 // pred_check
          %p700 = pneg %p168
        $region54: #{rnn_forward.2} parent=39 // pred_check_branch
          %702 = sbr.rel (%p700) target = $region56
        $region55: #{rnn_forward.2} parent=39 // pred_region
          _
        $region56: #{rnn_forward.2} parent=39 // pred_fallthru
          _
        // Predicated region
        $region57: #{rnn_forward.2} parent=39 // pred_check
          %p703 = pneg %p168
        $region58: #{rnn_forward.2} parent=39 // pred_check_branch
          %705 = sbr.rel (%p703) target = $region60
        $region59: #{rnn_forward.2} parent=39 // pred_region
          _
        $region60: #{rnn_forward.2} parent=39 // pred_fallthru
          _
      $region40: #{rnn_forward.2} parent=5 // pred_fallthru
        _
      %p706 = scmp.le.s32.totalorder 2, %s14
      // Predicated region
      $region61: #{rnn_forward.2} parent=5 // pred_check
        %p707 = pneg %p706
      $region62: #{rnn_forward.2} parent=5 // pred_check_branch
        %709 = sbr.rel (%p707) target = $region64
      $region63: #{rnn_forward.2} parent=5 // pred_region
        %s710 = ssub.s32 %s14, 2
        // Predicated region
        $region65: #{rnn_forward.2} parent=63 // pred_check
          %p711 = pneg %p153
        $region66: #{rnn_forward.2} parent=63 // pred_check_branch
          %713 = sbr.rel (%p711) target = $region68
        $region67: #{rnn_forward.2} parent=63 // pred_region
          %s714 = smul.u32 4, %s20
          %p715 = scmp.lt.s32.totalorder %s714, 7
          %s716 = scalar_select %p715, %s714, 7
          %s717 = smul.addr %s716, 8
          %s718 = scalar_lea.vmem %s5, %s717
        $region68: #{rnn_forward.2} parent=63 // pred_fallthru
          _
      $region64: #{rnn_forward.2} parent=5 // pred_fallthru
        _
    $region6: #{rnn_forward.2} parent=1 // loop_footer
      %s18 = sadd.s32 1, %s14
    $region7: #{rnn_forward.2} parent=1 // loop_footer_branch
      %13 = sbr.rel target = $region3
    $region8: #{rnn_forward.2} parent=1 // loop_exit
      _
    %719 = vsyncpa [#allocation3], 1
    %s720 = scalar_lea.sflag [#allocation3], 1
    %721 = vsyncpa %s720, 1

</llo_original>
